<compile_context>
chip_gen: v7x
topology: tpu7x:2x2x1
jax: 0.10.0
libtpu: 0.0.40
codegen_flags: <defaults>
</compile_context>

<pallas_src>
import jax
import jax.numpy as jnp
from jax.experimental import pallas as pl
from jax.experimental.pallas import tpu as pltpu

# ----------------------------- small config ---------------------------------
VOCAB      = 100   # synthetic vocab
TYPE_VOCAB = 2
MAX_POS    = 16
B, S       = 2, 8          # batch, sequence length
H          = 32            # args.bert_dim
NH         = 4             # attention heads
HD         = H // NH       # head dim
FF         = 64            # FFN intermediate
NUM_LAYERS = 2
CLASS_NUM  = 3             # args.class_num
FC_PAD     = 128           # lane-dense padded classifier output width
LN_EPS     = 1e-12
N_ROWS     = NH * B * S    # 64: (head, batch, seq)-stacked attention rows


# ----------------------------- kernel helpers --------------------------------
def _layer_norm(x, g, b):
    mu = jnp.mean(x, axis=-1, keepdims=True)
    var = jnp.mean((x - mu) * (x - mu), axis=-1, keepdims=True)
    return (x - mu) * jax.lax.rsqrt(var + LN_EPS) * g + b


def _gelu(x):
    # TODO(synk): HF BERT uses exact erf-gelu; tanh approximation used here
    # (erf has no clean Mosaic lowering). Numerically ~1e-3 close.
    c = 0.7978845608028654  # sqrt(2/pi)
    return 0.5 * x * (1.0 + jnp.tanh(c * (x + 0.044715 * x * x * x)))


# ------------------- fully fused BERT + head kernel --------------------------
# All layer-stacked weights are whole VMEM-resident arrays; layers are a static
# in-kernel loop.  Per-layer bias/LN vectors arrive packed in one (8,128) slab:
#   row 0: bqkv (3H, head-grouped, Q scaled)  row 1: bo (H)
#   row 2: ln1_g (H)  row 3: ln1_b (H)
#   row 4: bi (FF)    row 5: bf (H)   row 6: ln2_g (H)  row 7: ln2_b (H)
def bert_kernel(x_ref, bias_ref, wqkv_ref, wo_ref, wi_ref, wf_ref, vec_ref,
                fcw_ref, fcb_ref, out_ref):
    x = x_ref[...]                                   # (B*S, H)
    bias = bias_ref[...]                             # (N_ROWS, N_ROWS) additive mask

    for l in range(NUM_LAYERS):
        vec = vec_ref[l]                             # (8, 128) bias/LN slab

        # --- fused, head-grouped QKV projection (scale folded into Q) ---
        qkv = (jnp.dot(x, wqkv_ref[l], preferred_element_type=jnp.float32)
               + vec[0:1, :3 * H])                   # (B*S, 3H), cols = (head, q|k|v, d)

        # --- stack heads onto the row axis: (NH*B*S, 3*HD) ---
        qkv_s = jnp.concatenate(
            [qkv[:, h * 3 * HD:(h + 1) * 3 * HD] for h in range(NH)], axis=0)
        q = qkv_s[:, 0:HD]                           # (64, 8)
        k = qkv_s[:, HD:2 * HD]
        v = qkv_s[:, 2 * HD:3 * HD]

        # --- block-diagonal attention: 2 matmuls + 1 softmax per layer ---
        sc = jnp.dot(q, k.T, preferred_element_type=jnp.float32) + bias   # (64, 64)
        sc = sc - jnp.max(sc, axis=-1, keepdims=True)
        p = jnp.exp(sc)
        p = p * pl.reciprocal(jnp.sum(p, axis=-1, keepdims=True), approx=True)
        ctx = jnp.dot(p, v, preferred_element_type=jnp.float32)           # (64, 8)

        # --- un-stack heads back onto the lane axis: (B*S, H) ---
        ctx_m = jnp.concatenate(
            [ctx[h * B * S:(h + 1) * B * S, :] for h in range(NH)], axis=1)

        # --- attention output projection + residual + LayerNorm ---
        attn = (jnp.dot(ctx_m, wo_ref[l], preferred_element_type=jnp.float32)
                + vec[1:2, :H])
        h1 = _layer_norm(x + attn, vec[2:3, :H], vec[3:4, :H])

        # --- feed-forward + residual + LayerNorm ---
        ff = _gelu(jnp.dot(h1, wi_ref[l], preferred_element_type=jnp.float32)
                   + vec[4:5, :FF])
        ff = jnp.dot(ff, wf_ref[l], preferred_element_type=jnp.float32) + vec[5:6, :H]
        x = _layer_norm(h1 + ff, vec[6:7, :H], vec[7:8, :H])

    # --- fused pooling + classifier head (lane-dense 128-wide output) ---
    # NOTE: like the PyTorch reference, pooling runs over the full sequence
    # (padded positions included) — AdaptiveAvg/MaxPool1d(1) is not masked.
    wv = x.reshape(B, S, H)
    avg_feature = jnp.mean(wv, axis=1)               # AdaptiveAvgPool1d(1)
    max_feature = jnp.max(wv, axis=1)                # AdaptiveMaxPool1d(1)
    feature = jnp.concatenate([avg_feature, max_feature], axis=-1)   # (B, 2H)
    out_ref[...] = (jnp.dot(feature, fcw_ref[...],
                            preferred_element_type=jnp.float32) + fcb_ref[...])


def run_model(x2, att_bias, wqkv, wo, wi, wf, vecs, fc_w_pad, fc_b_pad):
    return pl.pallas_call(
        bert_kernel,
        out_shape=jax.ShapeDtypeStruct((B, FC_PAD), jnp.float32),
        in_specs=[pl.BlockSpec(memory_space=pltpu.MemorySpace.VMEM)] * 9,
        out_specs=pl.BlockSpec(memory_space=pltpu.MemorySpace.VMEM),
    )(x2, att_bias, wqkv, wo, wi, wf, vecs, fc_w_pad, fc_b_pad)


# --------------------------- parameter creation -------------------------------
def init_params(key):
    ks = iter(jax.random.split(key, 48))

    def nrm(shape, scale=0.02):
        return scale * jax.random.normal(next(ks), shape, dtype=jnp.float32)

    params = {
        'word_emb': nrm((VOCAB, H)),
        'pos_emb':  nrm((MAX_POS, H)),
        'type_emb': nrm((TYPE_VOCAB, H)),
        'emb_ln_g': jnp.ones((H,), jnp.float32),
        'emb_ln_b': jnp.zeros((H,), jnp.float32),
    }

    # classifier: nn.Linear(bert_dim*2, class_num), padded to lane-dense 128 output
    fc_w = nrm((2 * H, CLASS_NUM))
    fc_b = nrm((1, CLASS_NUM))
    params['fc_w_pad'] = jnp.zeros((2 * H, FC_PAD), jnp.float32).at[:, :CLASS_NUM].set(fc_w)
    params['fc_b_pad'] = jnp.zeros((1, FC_PAD), jnp.float32).at[:, :CLASS_NUM].set(fc_b)

    scale = 1.0 / (HD ** 0.5)
    wqkv_l, wo_l, wi_l, wf_l, vec_l = [], [], [], [], []
    for _ in range(NUM_LAYERS):
        wq, wk, wv = nrm((H, H)), nrm((H, H)), nrm((H, H))
        bq, bk, bv = nrm((H,)), nrm((H,)), nrm((H,))

        # head-grouped QKV weight/bias, 1/sqrt(HD) folded into the Q columns:
        # columns ordered [q_h, k_h, v_h] for h = 0..NH-1
        w_blocks, b_blocks = [], []
        for h in range(NH):
            sl = slice(h * HD, (h + 1) * HD)
            w_blocks += [wq[:, sl] * scale, wk[:, sl], wv[:, sl]]
            b_blocks += [bq[sl] * scale, bk[sl], bv[sl]]
        wqkv_l.append(jnp.concatenate(w_blocks, axis=1))   # (H, 3H)
        bqkv = jnp.concatenate(b_blocks)                   # (3H,)

        wo_l.append(nrm((H, H)))
        wi_l.append(nrm((H, FF)))
        wf_l.append(nrm((FF, H)))
        bo, bi, bf = nrm((H,)), nrm((FF,)), nrm((H,))
        ln1g, ln1b = jnp.ones((H,), jnp.float32), jnp.zeros((H,), jnp.float32)
        ln2g, ln2b = jnp.ones((H,), jnp.float32), jnp.zeros((H,), jnp.float32)

        slab = jnp.zeros((8, 128), jnp.float32)
        slab = slab.at[0, :3 * H].set(bqkv)
        slab = slab.at[1, :H].set(bo)
        slab = slab.at[2, :H].set(ln1g)
        slab = slab.at[3, :H].set(ln1b)
        slab = slab.at[4, :FF].set(bi)
        slab = slab.at[5, :H].set(bf)
        slab = slab.at[6, :H].set(ln2g)
        slab = slab.at[7, :H].set(ln2b)
        vec_l.append(slab)

    params['wqkv'] = jnp.stack(wqkv_l)   # (L, H, 3H)
    params['wo']   = jnp.stack(wo_l)     # (L, H, H)
    params['wi']   = jnp.stack(wi_l)     # (L, H, FF)
    params['wf']   = jnp.stack(wf_l)     # (L, FF, H)
    params['vecs'] = jnp.stack(vec_l)    # (L, 8, 128)
    return params


# ------------------------------ forward pass -----------------------------------
@jax.jit
def bert_classifi_forward(params, input_id, token_type_ids, attention_mask):
    # --- embeddings (gather + LayerNorm): plain-JAX glue, not the hot path ---
    pos_ids = jnp.arange(input_id.shape[1])
    x = (params['word_emb'][input_id]
         + params['pos_emb'][pos_ids][None, :, :]
         + params['type_emb'][token_type_ids])
    mu = jnp.mean(x, axis=-1, keepdims=True)
    var = jnp.mean((x - mu) ** 2, axis=-1, keepdims=True)
    x = (x - mu) / jnp.sqrt(var + LN_EPS) * params['emb_ln_g'] + params['emb_ln_b']
    x2 = x.reshape(B * S, H)                             # 2-D activations end to end

    # --- precomputed (64,64) additive bias: -1e9 off the (head,batch) diagonal
    #     blocks, attention (key-padding) mask folded in ---
    idx = jnp.arange(N_ROWS)
    head = idx // (B * S)
    batch = (idx % (B * S)) // S
    spos = idx % S
    key_valid = attention_mask[batch, spos]              # (64,) validity of key cols
    same_block = (head[:, None] == head[None, :]) & (batch[:, None] == batch[None, :])
    ok = same_block & (key_valid[None, :] > 0)
    att_bias = jnp.where(ok, 0.0, -1e9).astype(jnp.float32)

    # --- whole BERT encoder + pooling + classifier: ONE Pallas kernel ---
    # word_vec = last hidden state; bert_dropout / fc_dropout are identity at inference.
    out_pad = run_model(x2, att_bias, params['wqkv'], params['wo'],
                        params['wi'], params['wf'], params['vecs'],
                        params['fc_w_pad'], params['fc_b_pad'])
    return out_pad[:, :CLASS_NUM]        # slice lane-dense output back to class_num


# --------------------------------- main ----------------------------------------
if __name__ == "__main__":
    key = jax.random.PRNGKey(0)
    k_ids, k_par = jax.random.split(key)

    input_id = jax.random.randint(k_ids, (B, S), 0, VOCAB, dtype=jnp.int32)
    token_type_ids = jnp.zeros((B, S), dtype=jnp.int32)
    attention_mask = jnp.ones((B, S), dtype=jnp.int32).at[1, 6:].set(0)  # pad tail of 2nd ex.

    params = init_params(k_par)

    out = bert_classifi_forward(params, input_id, token_type_ids, attention_mask)
    out = jax.block_until_ready(out)

    assert out.shape == (B, CLASS_NUM), out.shape
    assert bool(jnp.all(jnp.isfinite(out)))
    print("KERNEL_OK")
</pallas_src>

<mosaic_0001>
module attributes {stable_mosaic.version = 11 : i64} {
  func.func @bert_kernel(%arg0: memref<16x32xf32, #tpu.memory_space<vmem>>, %arg1: memref<64x64xf32, #tpu.memory_space<vmem>>, %arg2: memref<2x32x96xf32, #tpu.memory_space<vmem>>, %arg3: memref<2x32x32xf32, #tpu.memory_space<vmem>>, %arg4: memref<2x32x64xf32, #tpu.memory_space<vmem>>, %arg5: memref<2x64x32xf32, #tpu.memory_space<vmem>>, %arg6: memref<2x8x128xf32, #tpu.memory_space<vmem>>, %arg7: memref<64x128xf32, #tpu.memory_space<vmem>>, %arg8: memref<1x128xf32, #tpu.memory_space<vmem>>, %arg9: memref<2x128xf32, #tpu.memory_space<vmem>>) attributes {dimension_semantics = [], scalar_prefetch = 0 : i64, scratch_operands = 0 : i64, tpu.core_type = #tpu.core_type<tc>} {
    %c0 = arith.constant 0 : index
    %c0_0 = arith.constant 0 : index
    %0 = vector.load %arg0[%c0, %c0_0] : memref<16x32xf32, #tpu.memory_space<vmem>>, vector<16x32xf32>
    %c0_1 = arith.constant 0 : index
    %c0_2 = arith.constant 0 : index
    %1 = vector.load %arg1[%c0_1, %c0_2] : memref<64x64xf32, #tpu.memory_space<vmem>>, vector<64x64xf32>
    %c0_3 = arith.constant 0 : index
    %c0_4 = arith.constant 0 : index
    %c0_5 = arith.constant 0 : index
    %2 = vector.load %arg6[%c0_3, %c0_4, %c0_5] : memref<2x8x128xf32, #tpu.memory_space<vmem>>, vector<1x8x128xf32>
    %3 = vector.shape_cast %2 : vector<1x8x128xf32> to vector<8x128xf32>
    %c0_6 = arith.constant 0 : index
    %c0_7 = arith.constant 0 : index
    %c0_8 = arith.constant 0 : index
    %4 = vector.load %arg2[%c0_6, %c0_7, %c0_8] : memref<2x32x96xf32, #tpu.memory_space<vmem>>, vector<1x32x96xf32>
    %5 = vector.shape_cast %4 : vector<1x32x96xf32> to vector<32x96xf32>
    %cst = arith.constant dense<0.000000e+00> : vector<16x96xf32>
    %6 = tpu.matmul %0, %5, %cst {dimension_numbers = #tpu.dot_dimension_numbers<[1], [0], [0], [1], [0, 0, 1, 1], [], []>} : vector<16x32xf32>, vector<32x96xf32>, vector<16x96xf32> -> vector<16x96xf32>
    %7 = vector.extract_strided_slice %3 {offsets = [0, 0], sizes = [1, 96], strides = [1, 1]} : vector<8x128xf32> to vector<1x96xf32>
    %8 = vector.broadcast %7 : vector<1x96xf32> to vector<16x96xf32>
    %9 = arith.addf %6, %8 : vector<16x96xf32>
    %10 = vector.extract_strided_slice %9 {offsets = [0, 0], sizes = [16, 24], strides = [1, 1]} : vector<16x96xf32> to vector<16x24xf32>
    %11 = vector.extract_strided_slice %9 {offsets = [0, 24], sizes = [16, 24], strides = [1, 1]} : vector<16x96xf32> to vector<16x24xf32>
    %12 = vector.extract_strided_slice %9 {offsets = [0, 48], sizes = [16, 24], strides = [1, 1]} : vector<16x96xf32> to vector<16x24xf32>
    %13 = vector.extract_strided_slice %9 {offsets = [0, 72], sizes = [16, 24], strides = [1, 1]} : vector<16x96xf32> to vector<16x24xf32>
    %14 = tpu.concatenate %10, %11, %12, %13 in 0 : vector<16x24xf32>, vector<16x24xf32>, vector<16x24xf32>, vector<16x24xf32> -> vector<64x24xf32>
    %15 = vector.extract_strided_slice %14 {offsets = [0, 0], sizes = [64, 8], strides = [1, 1]} : vector<64x24xf32> to vector<64x8xf32>
    %16 = vector.extract_strided_slice %14 {offsets = [0, 8], sizes = [64, 8], strides = [1, 1]} : vector<64x24xf32> to vector<64x8xf32>
    %17 = vector.extract_strided_slice %14 {offsets = [0, 16], sizes = [64, 8], strides = [1, 1]} : vector<64x24xf32> to vector<64x8xf32>
    %18 = tpu.transpose %16, [1, 0] : vector<64x8xf32> -> vector<8x64xf32>
    %cst_9 = arith.constant dense<0.000000e+00> : vector<64x64xf32>
    %19 = tpu.matmul %15, %18, %cst_9 {dimension_numbers = #tpu.dot_dimension_numbers<[1], [0], [0], [1], [0, 0, 1, 1], [], []>} : vector<64x8xf32>, vector<8x64xf32>, vector<64x64xf32> -> vector<64x64xf32>
    %20 = arith.addf %19, %1 : vector<64x64xf32>
    %cst_10 = arith.constant dense<0xFF800000> : vector<64xf32>
    %21 = vector.multi_reduction <maximumf>, %20, %cst_10 [1] : vector<64x64xf32> to vector<64xf32>
    %22 = vector.shape_cast %21 : vector<64xf32> to vector<64x1xf32>
    %23 = vector.broadcast %22 : vector<64x1xf32> to vector<64x64xf32>
    %24 = arith.subf %20, %23 : vector<64x64xf32>
    %25 = math.exp %24 : vector<64x64xf32>
    %cst_11 = arith.constant dense<0.000000e+00> : vector<64xf32>
    %26 = vector.multi_reduction <add>, %25, %cst_11 [1] : vector<64x64xf32> to vector<64xf32>
    %27 = vector.shape_cast %26 : vector<64xf32> to vector<64x1xf32>
    %28 = tpu.reciprocal %27 {approx = true} : vector<64x1xf32> -> vector<64x1xf32>
    %29 = vector.broadcast %28 : vector<64x1xf32> to vector<64x64xf32>
    %30 = arith.mulf %25, %29 : vector<64x64xf32>
    %cst_12 = arith.constant dense<0.000000e+00> : vector<64x8xf32>
    %31 = tpu.matmul %30, %17, %cst_12 {dimension_numbers = #tpu.dot_dimension_numbers<[1], [0], [0], [1], [0, 0, 1, 1], [], []>} : vector<64x64xf32>, vector<64x8xf32>, vector<64x8xf32> -> vector<64x8xf32>
    %32 = vector.extract_strided_slice %31 {offsets = [0, 0], sizes = [16, 8], strides = [1, 1]} : vector<64x8xf32> to vector<16x8xf32>
    %33 = vector.extract_strided_slice %31 {offsets = [16, 0], sizes = [16, 8], strides = [1, 1]} : vector<64x8xf32> to vector<16x8xf32>
    %34 = vector.extract_strided_slice %31 {offsets = [32, 0], sizes = [16, 8], strides = [1, 1]} : vector<64x8xf32> to vector<16x8xf32>
    %35 = vector.extract_strided_slice %31 {offsets = [48, 0], sizes = [16, 8], strides = [1, 1]} : vector<64x8xf32> to vector<16x8xf32>
    %36 = tpu.concatenate %32, %33, %34, %35 in 1 : vector<16x8xf32>, vector<16x8xf32>, vector<16x8xf32>, vector<16x8xf32> -> vector<16x32xf32>
    %c0_13 = arith.constant 0 : index
    %c0_14 = arith.constant 0 : index
    %c0_15 = arith.constant 0 : index
    %37 = vector.load %arg3[%c0_13, %c0_14, %c0_15] : memref<2x32x32xf32, #tpu.memory_space<vmem>>, vector<1x32x32xf32>
    %38 = vector.shape_cast %37 : vector<1x32x32xf32> to vector<32x32xf32>
    %cst_16 = arith.constant dense<0.000000e+00> : vector<16x32xf32>
    %39 = tpu.matmul %36, %38, %cst_16 {dimension_numbers = #tpu.dot_dimension_numbers<[1], [0], [0], [1], [0, 0, 1, 1], [], []>} : vector<16x32xf32>, vector<32x32xf32>, vector<16x32xf32> -> vector<16x32xf32>
    %40 = vector.extract_strided_slice %3 {offsets = [1, 0], sizes = [1, 32], strides = [1, 1]} : vector<8x128xf32> to vector<1x32xf32>
    %41 = vector.broadcast %40 : vector<1x32xf32> to vector<16x32xf32>
    %42 = arith.addf %39, %41 : vector<16x32xf32>
    %43 = arith.addf %0, %42 : vector<16x32xf32>
    %44 = vector.extract_strided_slice %3 {offsets = [2, 0], sizes = [1, 32], strides = [1, 1]} : vector<8x128xf32> to vector<1x32xf32>
    %45 = vector.extract_strided_slice %3 {offsets = [3, 0], sizes = [1, 32], strides = [1, 1]} : vector<8x128xf32> to vector<1x32xf32>
    %cst_17 = arith.constant dense<0.000000e+00> : vector<16xf32>
    %46 = vector.multi_reduction <add>, %43, %cst_17 [1] : vector<16x32xf32> to vector<16xf32>
    %47 = vector.shape_cast %46 : vector<16xf32> to vector<16x1xf32>
    %cst_18 = arith.constant 3.200000e+01 : f32
    %48 = vector.broadcast %cst_18 : f32 to vector<16x1xf32>
    %49 = arith.divf %47, %48 : vector<16x1xf32>
    %50 = vector.broadcast %49 : vector<16x1xf32> to vector<16x32xf32>
    %51 = arith.subf %43, %50 : vector<16x32xf32>
    %52 = vector.broadcast %49 : vector<16x1xf32> to vector<16x32xf32>
    %53 = arith.subf %43, %52 : vector<16x32xf32>
    %54 = arith.mulf %51, %53 : vector<16x32xf32>
    %cst_19 = arith.constant dense<0.000000e+00> : vector<16xf32>
    %55 = vector.multi_reduction <add>, %54, %cst_19 [1] : vector<16x32xf32> to vector<16xf32>
    %56 = vector.shape_cast %55 : vector<16xf32> to vector<16x1xf32>
    %cst_20 = arith.constant 3.200000e+01 : f32
    %57 = vector.broadcast %cst_20 : f32 to vector<16x1xf32>
    %58 = arith.divf %56, %57 : vector<16x1xf32>
    %59 = vector.broadcast %49 : vector<16x1xf32> to vector<16x32xf32>
    %60 = arith.subf %43, %59 : vector<16x32xf32>
    %cst_21 = arith.constant 9.99999996E-13 : f32
    %61 = vector.broadcast %cst_21 : f32 to vector<16x1xf32>
    %62 = arith.addf %58, %61 : vector<16x1xf32>
    %63 = math.rsqrt %62 : vector<16x1xf32>
    %64 = vector.broadcast %63 : vector<16x1xf32> to vector<16x32xf32>
    %65 = arith.mulf %60, %64 : vector<16x32xf32>
    %66 = vector.broadcast %44 : vector<1x32xf32> to vector<16x32xf32>
    %67 = arith.mulf %65, %66 : vector<16x32xf32>
    %68 = vector.broadcast %45 : vector<1x32xf32> to vector<16x32xf32>
    %69 = arith.addf %67, %68 : vector<16x32xf32>
    %c0_22 = arith.constant 0 : index
    %c0_23 = arith.constant 0 : index
    %c0_24 = arith.constant 0 : index
    %70 = vector.load %arg4[%c0_22, %c0_23, %c0_24] : memref<2x32x64xf32, #tpu.memory_space<vmem>>, vector<1x32x64xf32>
    %71 = vector.shape_cast %70 : vector<1x32x64xf32> to vector<32x64xf32>
    %cst_25 = arith.constant dense<0.000000e+00> : vector<16x64xf32>
    %72 = tpu.matmul %69, %71, %cst_25 {dimension_numbers = #tpu.dot_dimension_numbers<[1], [0], [0], [1], [0, 0, 1, 1], [], []>} : vector<16x32xf32>, vector<32x64xf32>, vector<16x64xf32> -> vector<16x64xf32>
    %73 = vector.extract_strided_slice %3 {offsets = [4, 0], sizes = [1, 64], strides = [1, 1]} : vector<8x128xf32> to vector<1x64xf32>
    %74 = vector.broadcast %73 : vector<1x64xf32> to vector<16x64xf32>
    %75 = arith.addf %72, %74 : vector<16x64xf32>
    %cst_26 = arith.constant 5.000000e-01 : f32
    %76 = vector.broadcast %cst_26 : f32 to vector<16x64xf32>
    %77 = arith.mulf %76, %75 : vector<16x64xf32>
    %cst_27 = arith.constant 4.471500e-02 : f32
    %78 = vector.broadcast %cst_27 : f32 to vector<16x64xf32>
    %79 = arith.mulf %78, %75 : vector<16x64xf32>
    %80 = arith.mulf %79, %75 : vector<16x64xf32>
    %81 = arith.mulf %80, %75 : vector<16x64xf32>
    %82 = arith.addf %75, %81 : vector<16x64xf32>
    %cst_28 = arith.constant 0.797884583 : f32
    %83 = vector.broadcast %cst_28 : f32 to vector<16x64xf32>
    %84 = arith.mulf %83, %82 : vector<16x64xf32>
    %85 = math.tanh %84 : vector<16x64xf32>
    %cst_29 = arith.constant 1.000000e+00 : f32
    %86 = vector.broadcast %cst_29 : f32 to vector<16x64xf32>
    %87 = arith.addf %86, %85 : vector<16x64xf32>
    %88 = arith.mulf %77, %87 : vector<16x64xf32>
    %c0_30 = arith.constant 0 : index
    %c0_31 = arith.constant 0 : index
    %c0_32 = arith.constant 0 : index
    %89 = vector.load %arg5[%c0_30, %c0_31, %c0_32] : memref<2x64x32xf32, #tpu.memory_space<vmem>>, vector<1x64x32xf32>
    %90 = vector.shape_cast %89 : vector<1x64x32xf32> to vector<64x32xf32>
    %cst_33 = arith.constant dense<0.000000e+00> : vector<16x32xf32>
    %91 = tpu.matmul %88, %90, %cst_33 {dimension_numbers = #tpu.dot_dimension_numbers<[1], [0], [0], [1], [0, 0, 1, 1], [], []>} : vector<16x64xf32>, vector<64x32xf32>, vector<16x32xf32> -> vector<16x32xf32>
    %92 = vector.extract_strided_slice %3 {offsets = [5, 0], sizes = [1, 32], strides = [1, 1]} : vector<8x128xf32> to vector<1x32xf32>
    %93 = vector.broadcast %92 : vector<1x32xf32> to vector<16x32xf32>
    %94 = arith.addf %91, %93 : vector<16x32xf32>
    %95 = arith.addf %69, %94 : vector<16x32xf32>
    %96 = vector.extract_strided_slice %3 {offsets = [6, 0], sizes = [1, 32], strides = [1, 1]} : vector<8x128xf32> to vector<1x32xf32>
    %97 = vector.extract_strided_slice %3 {offsets = [7, 0], sizes = [1, 32], strides = [1, 1]} : vector<8x128xf32> to vector<1x32xf32>
    %cst_34 = arith.constant dense<0.000000e+00> : vector<16xf32>
    %98 = vector.multi_reduction <add>, %95, %cst_34 [1] : vector<16x32xf32> to vector<16xf32>
    %99 = vector.shape_cast %98 : vector<16xf32> to vector<16x1xf32>
    %cst_35 = arith.constant 3.200000e+01 : f32
    %100 = vector.broadcast %cst_35 : f32 to vector<16x1xf32>
    %101 = arith.divf %99, %100 : vector<16x1xf32>
    %102 = vector.broadcast %101 : vector<16x1xf32> to vector<16x32xf32>
    %103 = arith.subf %95, %102 : vector<16x32xf32>
    %104 = vector.broadcast %101 : vector<16x1xf32> to vector<16x32xf32>
    %105 = arith.subf %95, %104 : vector<16x32xf32>
    %106 = arith.mulf %103, %105 : vector<16x32xf32>
    %cst_36 = arith.constant dense<0.000000e+00> : vector<16xf32>
    %107 = vector.multi_reduction <add>, %106, %cst_36 [1] : vector<16x32xf32> to vector<16xf32>
    %108 = vector.shape_cast %107 : vector<16xf32> to vector<16x1xf32>
    %cst_37 = arith.constant 3.200000e+01 : f32
    %109 = vector.broadcast %cst_37 : f32 to vector<16x1xf32>
    %110 = arith.divf %108, %109 : vector<16x1xf32>
    %111 = vector.broadcast %101 : vector<16x1xf32> to vector<16x32xf32>
    %112 = arith.subf %95, %111 : vector<16x32xf32>
    %cst_38 = arith.constant 9.99999996E-13 : f32
    %113 = vector.broadcast %cst_38 : f32 to vector<16x1xf32>
    %114 = arith.addf %110, %113 : vector<16x1xf32>
    %115 = math.rsqrt %114 : vector<16x1xf32>
    %116 = vector.broadcast %115 : vector<16x1xf32> to vector<16x32xf32>
    %117 = arith.mulf %112, %116 : vector<16x32xf32>
    %118 = vector.broadcast %96 : vector<1x32xf32> to vector<16x32xf32>
    %119 = arith.mulf %117, %118 : vector<16x32xf32>
    %120 = vector.broadcast %97 : vector<1x32xf32> to vector<16x32xf32>
    %121 = arith.addf %119, %120 : vector<16x32xf32>
    %c1 = arith.constant 1 : index
    %c0_39 = arith.constant 0 : index
    %c0_40 = arith.constant 0 : index
    %122 = vector.load %arg6[%c1, %c0_39, %c0_40] : memref<2x8x128xf32, #tpu.memory_space<vmem>>, vector<1x8x128xf32>
    %123 = vector.shape_cast %122 : vector<1x8x128xf32> to vector<8x128xf32>
    %c1_41 = arith.constant 1 : index
    %c0_42 = arith.constant 0 : index
    %c0_43 = arith.constant 0 : index
    %124 = vector.load %arg2[%c1_41, %c0_42, %c0_43] : memref<2x32x96xf32, #tpu.memory_space<vmem>>, vector<1x32x96xf32>
    %125 = vector.shape_cast %124 : vector<1x32x96xf32> to vector<32x96xf32>
    %cst_44 = arith.constant dense<0.000000e+00> : vector<16x96xf32>
    %126 = tpu.matmul %121, %125, %cst_44 {dimension_numbers = #tpu.dot_dimension_numbers<[1], [0], [0], [1], [0, 0, 1, 1], [], []>} : vector<16x32xf32>, vector<32x96xf32>, vector<16x96xf32> -> vector<16x96xf32>
    %127 = vector.extract_strided_slice %123 {offsets = [0, 0], sizes = [1, 96], strides = [1, 1]} : vector<8x128xf32> to vector<1x96xf32>
    %128 = vector.broadcast %127 : vector<1x96xf32> to vector<16x96xf32>
    %129 = arith.addf %126, %128 : vector<16x96xf32>
    %130 = vector.extract_strided_slice %129 {offsets = [0, 0], sizes = [16, 24], strides = [1, 1]} : vector<16x96xf32> to vector<16x24xf32>
    %131 = vector.extract_strided_slice %129 {offsets = [0, 24], sizes = [16, 24], strides = [1, 1]} : vector<16x96xf32> to vector<16x24xf32>
    %132 = vector.extract_strided_slice %129 {offsets = [0, 48], sizes = [16, 24], strides = [1, 1]} : vector<16x96xf32> to vector<16x24xf32>
    %133 = vector.extract_strided_slice %129 {offsets = [0, 72], sizes = [16, 24], strides = [1, 1]} : vector<16x96xf32> to vector<16x24xf32>
    %134 = tpu.concatenate %130, %131, %132, %133 in 0 : vector<16x24xf32>, vector<16x24xf32>, vector<16x24xf32>, vector<16x24xf32> -> vector<64x24xf32>
    %135 = vector.extract_strided_slice %134 {offsets = [0, 0], sizes = [64, 8], strides = [1, 1]} : vector<64x24xf32> to vector<64x8xf32>
    %136 = vector.extract_strided_slice %134 {offsets = [0, 8], sizes = [64, 8], strides = [1, 1]} : vector<64x24xf32> to vector<64x8xf32>
    %137 = vector.extract_strided_slice %134 {offsets = [0, 16], sizes = [64, 8], strides = [1, 1]} : vector<64x24xf32> to vector<64x8xf32>
    %138 = tpu.transpose %136, [1, 0] : vector<64x8xf32> -> vector<8x64xf32>
    %cst_45 = arith.constant dense<0.000000e+00> : vector<64x64xf32>
    %139 = tpu.matmul %135, %138, %cst_45 {dimension_numbers = #tpu.dot_dimension_numbers<[1], [0], [0], [1], [0, 0, 1, 1], [], []>} : vector<64x8xf32>, vector<8x64xf32>, vector<64x64xf32> -> vector<64x64xf32>
    %140 = arith.addf %139, %1 : vector<64x64xf32>
    %cst_46 = arith.constant dense<0xFF800000> : vector<64xf32>
    %141 = vector.multi_reduction <maximumf>, %140, %cst_46 [1] : vector<64x64xf32> to vector<64xf32>
    %142 = vector.shape_cast %141 : vector<64xf32> to vector<64x1xf32>
    %143 = vector.broadcast %142 : vector<64x1xf32> to vector<64x64xf32>
    %144 = arith.subf %140, %143 : vector<64x64xf32>
    %145 = math.exp %144 : vector<64x64xf32>
    %cst_47 = arith.constant dense<0.000000e+00> : vector<64xf32>
    %146 = vector.multi_reduction <add>, %145, %cst_47 [1] : vector<64x64xf32> to vector<64xf32>
    %147 = vector.shape_cast %146 : vector<64xf32> to vector<64x1xf32>
    %148 = tpu.reciprocal %147 {approx = true} : vector<64x1xf32> -> vector<64x1xf32>
    %149 = vector.broadcast %148 : vector<64x1xf32> to vector<64x64xf32>
    %150 = arith.mulf %145, %149 : vector<64x64xf32>
    %cst_48 = arith.constant dense<0.000000e+00> : vector<64x8xf32>
    %151 = tpu.matmul %150, %137, %cst_48 {dimension_numbers = #tpu.dot_dimension_numbers<[1], [0], [0], [1], [0, 0, 1, 1], [], []>} : vector<64x64xf32>, vector<64x8xf32>, vector<64x8xf32> -> vector<64x8xf32>
    %152 = vector.extract_strided_slice %151 {offsets = [0, 0], sizes = [16, 8], strides = [1, 1]} : vector<64x8xf32> to vector<16x8xf32>
    %153 = vector.extract_strided_slice %151 {offsets = [16, 0], sizes = [16, 8], strides = [1, 1]} : vector<64x8xf32> to vector<16x8xf32>
    %154 = vector.extract_strided_slice %151 {offsets = [32, 0], sizes = [16, 8], strides = [1, 1]} : vector<64x8xf32> to vector<16x8xf32>
    %155 = vector.extract_strided_slice %151 {offsets = [48, 0], sizes = [16, 8], strides = [1, 1]} : vector<64x8xf32> to vector<16x8xf32>
    %156 = tpu.concatenate %152, %153, %154, %155 in 1 : vector<16x8xf32>, vector<16x8xf32>, vector<16x8xf32>, vector<16x8xf32> -> vector<16x32xf32>
    %c1_49 = arith.constant 1 : index
    %c0_50 = arith.constant 0 : index
    %c0_51 = arith.constant 0 : index
    %157 = vector.load %arg3[%c1_49, %c0_50, %c0_51] : memref<2x32x32xf32, #tpu.memory_space<vmem>>, vector<1x32x32xf32>
    %158 = vector.shape_cast %157 : vector<1x32x32xf32> to vector<32x32xf32>
    %cst_52 = arith.constant dense<0.000000e+00> : vector<16x32xf32>
    %159 = tpu.matmul %156, %158, %cst_52 {dimension_numbers = #tpu.dot_dimension_numbers<[1], [0], [0], [1], [0, 0, 1, 1], [], []>} : vector<16x32xf32>, vector<32x32xf32>, vector<16x32xf32> -> vector<16x32xf32>
    %160 = vector.extract_strided_slice %123 {offsets = [1, 0], sizes = [1, 32], strides = [1, 1]} : vector<8x128xf32> to vector<1x32xf32>
    %161 = vector.broadcast %160 : vector<1x32xf32> to vector<16x32xf32>
    %162 = arith.addf %159, %161 : vector<16x32xf32>
    %163 = arith.addf %121, %162 : vector<16x32xf32>
    %164 = vector.extract_strided_slice %123 {offsets = [2, 0], sizes = [1, 32], strides = [1, 1]} : vector<8x128xf32> to vector<1x32xf32>
    %165 = vector.extract_strided_slice %123 {offsets = [3, 0], sizes = [1, 32], strides = [1, 1]} : vector<8x128xf32> to vector<1x32xf32>
    %cst_53 = arith.constant dense<0.000000e+00> : vector<16xf32>
    %166 = vector.multi_reduction <add>, %163, %cst_53 [1] : vector<16x32xf32> to vector<16xf32>
    %167 = vector.shape_cast %166 : vector<16xf32> to vector<16x1xf32>
    %cst_54 = arith.constant 3.200000e+01 : f32
    %168 = vector.broadcast %cst_54 : f32 to vector<16x1xf32>
    %169 = arith.divf %167, %168 : vector<16x1xf32>
    %170 = vector.broadcast %169 : vector<16x1xf32> to vector<16x32xf32>
    %171 = arith.subf %163, %170 : vector<16x32xf32>
    %172 = vector.broadcast %169 : vector<16x1xf32> to vector<16x32xf32>
    %173 = arith.subf %163, %172 : vector<16x32xf32>
    %174 = arith.mulf %171, %173 : vector<16x32xf32>
    %cst_55 = arith.constant dense<0.000000e+00> : vector<16xf32>
    %175 = vector.multi_reduction <add>, %174, %cst_55 [1] : vector<16x32xf32> to vector<16xf32>
    %176 = vector.shape_cast %175 : vector<16xf32> to vector<16x1xf32>
    %cst_56 = arith.constant 3.200000e+01 : f32
    %177 = vector.broadcast %cst_56 : f32 to vector<16x1xf32>
    %178 = arith.divf %176, %177 : vector<16x1xf32>
    %179 = vector.broadcast %169 : vector<16x1xf32> to vector<16x32xf32>
    %180 = arith.subf %163, %179 : vector<16x32xf32>
    %cst_57 = arith.constant 9.99999996E-13 : f32
    %181 = vector.broadcast %cst_57 : f32 to vector<16x1xf32>
    %182 = arith.addf %178, %181 : vector<16x1xf32>
    %183 = math.rsqrt %182 : vector<16x1xf32>
    %184 = vector.broadcast %183 : vector<16x1xf32> to vector<16x32xf32>
    %185 = arith.mulf %180, %184 : vector<16x32xf32>
    %186 = vector.broadcast %164 : vector<1x32xf32> to vector<16x32xf32>
    %187 = arith.mulf %185, %186 : vector<16x32xf32>
    %188 = vector.broadcast %165 : vector<1x32xf32> to vector<16x32xf32>
    %189 = arith.addf %187, %188 : vector<16x32xf32>
    %c1_58 = arith.constant 1 : index
    %c0_59 = arith.constant 0 : index
    %c0_60 = arith.constant 0 : index
    %190 = vector.load %arg4[%c1_58, %c0_59, %c0_60] : memref<2x32x64xf32, #tpu.memory_space<vmem>>, vector<1x32x64xf32>
    %191 = vector.shape_cast %190 : vector<1x32x64xf32> to vector<32x64xf32>
    %cst_61 = arith.constant dense<0.000000e+00> : vector<16x64xf32>
    %192 = tpu.matmul %189, %191, %cst_61 {dimension_numbers = #tpu.dot_dimension_numbers<[1], [0], [0], [1], [0, 0, 1, 1], [], []>} : vector<16x32xf32>, vector<32x64xf32>, vector<16x64xf32> -> vector<16x64xf32>
    %193 = vector.extract_strided_slice %123 {offsets = [4, 0], sizes = [1, 64], strides = [1, 1]} : vector<8x128xf32> to vector<1x64xf32>
    %194 = vector.broadcast %193 : vector<1x64xf32> to vector<16x64xf32>
    %195 = arith.addf %192, %194 : vector<16x64xf32>
    %cst_62 = arith.constant 5.000000e-01 : f32
    %196 = vector.broadcast %cst_62 : f32 to vector<16x64xf32>
    %197 = arith.mulf %196, %195 : vector<16x64xf32>
    %cst_63 = arith.constant 4.471500e-02 : f32
    %198 = vector.broadcast %cst_63 : f32 to vector<16x64xf32>
    %199 = arith.mulf %198, %195 : vector<16x64xf32>
    %200 = arith.mulf %199, %195 : vector<16x64xf32>
    %201 = arith.mulf %200, %195 : vector<16x64xf32>
    %202 = arith.addf %195, %201 : vector<16x64xf32>
    %cst_64 = arith.constant 0.797884583 : f32
    %203 = vector.broadcast %cst_64 : f32 to vector<16x64xf32>
    %204 = arith.mulf %203, %202 : vector<16x64xf32>
    %205 = math.tanh %204 : vector<16x64xf32>
    %cst_65 = arith.constant 1.000000e+00 : f32
    %206 = vector.broadcast %cst_65 : f32 to vector<16x64xf32>
    %207 = arith.addf %206, %205 : vector<16x64xf32>
    %208 = arith.mulf %197, %207 : vector<16x64xf32>
    %c1_66 = arith.constant 1 : index
    %c0_67 = arith.constant 0 : index
    %c0_68 = arith.constant 0 : index
    %209 = vector.load %arg5[%c1_66, %c0_67, %c0_68] : memref<2x64x32xf32, #tpu.memory_space<vmem>>, vector<1x64x32xf32>
    %210 = vector.shape_cast %209 : vector<1x64x32xf32> to vector<64x32xf32>
    %cst_69 = arith.constant dense<0.000000e+00> : vector<16x32xf32>
    %211 = tpu.matmul %208, %210, %cst_69 {dimension_numbers = #tpu.dot_dimension_numbers<[1], [0], [0], [1], [0, 0, 1, 1], [], []>} : vector<16x64xf32>, vector<64x32xf32>, vector<16x32xf32> -> vector<16x32xf32>
    %212 = vector.extract_strided_slice %123 {offsets = [5, 0], sizes = [1, 32], strides = [1, 1]} : vector<8x128xf32> to vector<1x32xf32>
    %213 = vector.broadcast %212 : vector<1x32xf32> to vector<16x32xf32>
    %214 = arith.addf %211, %213 : vector<16x32xf32>
    %215 = arith.addf %189, %214 : vector<16x32xf32>
    %216 = vector.extract_strided_slice %123 {offsets = [6, 0], sizes = [1, 32], strides = [1, 1]} : vector<8x128xf32> to vector<1x32xf32>
    %217 = vector.extract_strided_slice %123 {offsets = [7, 0], sizes = [1, 32], strides = [1, 1]} : vector<8x128xf32> to vector<1x32xf32>
    %cst_70 = arith.constant dense<0.000000e+00> : vector<16xf32>
    %218 = vector.multi_reduction <add>, %215, %cst_70 [1] : vector<16x32xf32> to vector<16xf32>
    %219 = vector.shape_cast %218 : vector<16xf32> to vector<16x1xf32>
    %cst_71 = arith.constant 3.200000e+01 : f32
    %220 = vector.broadcast %cst_71 : f32 to vector<16x1xf32>
    %221 = arith.divf %219, %220 : vector<16x1xf32>
    %222 = vector.broadcast %221 : vector<16x1xf32> to vector<16x32xf32>
    %223 = arith.subf %215, %222 : vector<16x32xf32>
    %224 = vector.broadcast %221 : vector<16x1xf32> to vector<16x32xf32>
    %225 = arith.subf %215, %224 : vector<16x32xf32>
    %226 = arith.mulf %223, %225 : vector<16x32xf32>
    %cst_72 = arith.constant dense<0.000000e+00> : vector<16xf32>
    %227 = vector.multi_reduction <add>, %226, %cst_72 [1] : vector<16x32xf32> to vector<16xf32>
    %228 = vector.shape_cast %227 : vector<16xf32> to vector<16x1xf32>
    %cst_73 = arith.constant 3.200000e+01 : f32
    %229 = vector.broadcast %cst_73 : f32 to vector<16x1xf32>
    %230 = arith.divf %228, %229 : vector<16x1xf32>
    %231 = vector.broadcast %221 : vector<16x1xf32> to vector<16x32xf32>
    %232 = arith.subf %215, %231 : vector<16x32xf32>
    %cst_74 = arith.constant 9.99999996E-13 : f32
    %233 = vector.broadcast %cst_74 : f32 to vector<16x1xf32>
    %234 = arith.addf %230, %233 : vector<16x1xf32>
    %235 = math.rsqrt %234 : vector<16x1xf32>
    %236 = vector.broadcast %235 : vector<16x1xf32> to vector<16x32xf32>
    %237 = arith.mulf %232, %236 : vector<16x32xf32>
    %238 = vector.broadcast %216 : vector<1x32xf32> to vector<16x32xf32>
    %239 = arith.mulf %237, %238 : vector<16x32xf32>
    %240 = vector.broadcast %217 : vector<1x32xf32> to vector<16x32xf32>
    %241 = arith.addf %239, %240 : vector<16x32xf32>
    %242 = vector.shape_cast %241 : vector<16x32xf32> to vector<2x8x32xf32>
    %cst_75 = arith.constant dense<0.000000e+00> : vector<2x32xf32>
    %243 = vector.multi_reduction <add>, %242, %cst_75 [1] : vector<2x8x32xf32> to vector<2x32xf32>
    %cst_76 = arith.constant 8.000000e+00 : f32
    %244 = vector.broadcast %cst_76 : f32 to vector<2x32xf32>
    %245 = arith.divf %243, %244 : vector<2x32xf32>
    %cst_77 = arith.constant dense<0xFF800000> : vector<2x32xf32>
    %246 = vector.multi_reduction <maximumf>, %242, %cst_77 [1] : vector<2x8x32xf32> to vector<2x32xf32>
    %247 = tpu.concatenate %245, %246 in 1 : vector<2x32xf32>, vector<2x32xf32> -> vector<2x64xf32>
    %c0_78 = arith.constant 0 : index
    %c0_79 = arith.constant 0 : index
    %248 = vector.load %arg7[%c0_78, %c0_79] : memref<64x128xf32, #tpu.memory_space<vmem>>, vector<64x128xf32>
    %cst_80 = arith.constant dense<0.000000e+00> : vector<2x128xf32>
    %249 = tpu.matmul %247, %248, %cst_80 {dimension_numbers = #tpu.dot_dimension_numbers<[1], [0], [0], [1], [0, 0, 1, 1], [], []>} : vector<2x64xf32>, vector<64x128xf32>, vector<2x128xf32> -> vector<2x128xf32>
    %c0_81 = arith.constant 0 : index
    %c0_82 = arith.constant 0 : index
    %250 = vector.load %arg8[%c0_81, %c0_82] : memref<1x128xf32, #tpu.memory_space<vmem>>, vector<1x128xf32>
    %251 = vector.broadcast %250 : vector<1x128xf32> to vector<2x128xf32>
    %252 = arith.addf %249, %251 : vector<2x128xf32>
    %c0_83 = arith.constant 0 : index
    %c0_84 = arith.constant 0 : index
    %253 = vector.load %arg9[%c0_83, %c0_84] : memref<2x128xf32, #tpu.memory_space<vmem>>, vector<2x128xf32>
    tpu.vector_store %arg9[%c0_83, %c0_84], %252 {strides = array<i32>} : memref<2x128xf32, #tpu.memory_space<vmem>>, vector<2x128xf32>,
    return
  }
}

</mosaic_0001>

<llo_original>
// kernel: bert_classifi_forward.1
$region0: #{bert_classifi_forward.1}
  #allocation0 [shape = 'u32[]', space=smem, size = 0x4, offset = 0x4, fixed_abs, tag = 'smem constant byte address 0x4 - core index']
  #allocation1 [shape = 'u32[144,128]{1,0:T(1,128)}', space=vmem, size = 0x12000, scoped, tag = 'internal scratch']
  %s0 = inlined_call_operand.vmem [shape: f32[16,32], index: 0, kind: input, shape index: {}]
  %s1 = inlined_call_operand.vmem [shape: f32[64,64], index: 1, kind: input, shape index: {}]
  %s2 = inlined_call_operand.vmem [shape: f32[2,32,96], index: 2, kind: input, shape index: {}]
  %s3 = inlined_call_operand.vmem [shape: f32[2,32,32], index: 3, kind: input, shape index: {}]
  %s4 = inlined_call_operand.vmem [shape: f32[2,32,64], index: 4, kind: input, shape index: {}]
  %s5 = inlined_call_operand.vmem [shape: f32[2,64,32], index: 5, kind: input, shape index: {}]
  %s6 = inlined_call_operand.vmem [shape: f32[2,8,128], index: 6, kind: input, shape index: {}]
  %s7 = inlined_call_operand.vmem [shape: f32[64,128], index: 7, kind: input, shape index: {}]
  %s8 = inlined_call_operand.vmem [shape: f32[1,128], index: 8, kind: input, shape index: {}]
  %s9 = inlined_call_operand.hbm [shape: f32[2,128], index: 9, kind: output, shape index: {}]
  %s10 = sld [smem:[#allocation0]]
  $region46: #{bert_classifi_forward.1} parent=0
    _
  %s12 = ssub.s32 1, %s10
  %s13 = scalar_select 0, %s12, %s10
  $region1: #{bert_classifi_forward.1} parent=0
    #allocation2 [shape = 'u8[1024]{0}', space=vmem, size = 0x400, scoped, tag = 'output window, operand 0, single buffered']
    #allocation3 [shape = 's32[1]{0}', space=sflag, size = 0x4, scoped, tag = 'scoped memory for bert_classifi_forward.1']
    %14 = vsyncpa [#allocation3], 0
    // Predicated region
    $region2: #{bert_classifi_forward.1} parent=1 // pred_check
      _
    $region3: #{bert_classifi_forward.1} parent=1 // pred_check_branch
      %16 = sbr.rel (0) target = $region5
    $region4: #{bert_classifi_forward.1} parent=1 // pred_region
      _
    $region5: #{bert_classifi_forward.1} parent=1 // pred_fallthru
      _
    // Predicated region
    $region6: #{bert_classifi_forward.1} parent=1 // pred_check
      _
    $region7: #{bert_classifi_forward.1} parent=1 // pred_check_branch
      %18 = sbr.rel (0) target = $region9
    $region8: #{bert_classifi_forward.1} parent=1 // pred_region
      _
    $region9: #{bert_classifi_forward.1} parent=1 // pred_fallthru
      _
    // Predicated region
    $region10: #{bert_classifi_forward.1} parent=1 // pred_check
      _
    $region11: #{bert_classifi_forward.1} parent=1 // pred_check_branch
      %20 = sbr.rel (0) target = $region13
    $region12: #{bert_classifi_forward.1} parent=1 // pred_region
      _
    $region13: #{bert_classifi_forward.1} parent=1 // pred_fallthru
      _
    // Predicated region
    $region14: #{bert_classifi_forward.1} parent=1 // pred_check
      _
    $region15: #{bert_classifi_forward.1} parent=1 // pred_check_branch
      %22 = sbr.rel (0) target = $region17
    $region16: #{bert_classifi_forward.1} parent=1 // pred_region
      _
    $region17: #{bert_classifi_forward.1} parent=1 // pred_fallthru
      _
    // Predicated region
    $region18: #{bert_classifi_forward.1} parent=1 // pred_check
      _
    $region19: #{bert_classifi_forward.1} parent=1 // pred_check_branch
      %24 = sbr.rel (0) target = $region21
    $region20: #{bert_classifi_forward.1} parent=1 // pred_region
      _
    $region21: #{bert_classifi_forward.1} parent=1 // pred_fallthru
      _
    // Predicated region
    $region22: #{bert_classifi_forward.1} parent=1 // pred_check
      _
    $region23: #{bert_classifi_forward.1} parent=1 // pred_check_branch
      %26 = sbr.rel (0) target = $region25
    $region24: #{bert_classifi_forward.1} parent=1 // pred_region
      _
    $region25: #{bert_classifi_forward.1} parent=1 // pred_fallthru
      _
    // Predicated region
    $region26: #{bert_classifi_forward.1} parent=1 // pred_check
      _
    $region27: #{bert_classifi_forward.1} parent=1 // pred_check_branch
      %28 = sbr.rel (0) target = $region29
    $region28: #{bert_classifi_forward.1} parent=1 // pred_region
      _
    $region29: #{bert_classifi_forward.1} parent=1 // pred_fallthru
      _
    // Predicated region
    $region30: #{bert_classifi_forward.1} parent=1 // pred_check
      _
    $region31: #{bert_classifi_forward.1} parent=1 // pred_check_branch
      %30 = sbr.rel (0) target = $region33
    $region32: #{bert_classifi_forward.1} parent=1 // pred_region
      _
    $region33: #{bert_classifi_forward.1} parent=1 // pred_fallthru
      _
    // Predicated region
    $region34: #{bert_classifi_forward.1} parent=1 // pred_check
      _
    $region35: #{bert_classifi_forward.1} parent=1 // pred_check_branch
      %32 = sbr.rel (0) target = $region37
    $region36: #{bert_classifi_forward.1} parent=1 // pred_region
      _
    $region37: #{bert_classifi_forward.1} parent=1 // pred_fallthru
      _
    %v33 = vld [vmem:[%s0] sm:$0xff]
    %v34 = vld [vmem:[%s0 + $0x8] sm:$0xff]
    %v35 = vld [vmem:[%s1] sm:$0xff]
    %v36 = vld [vmem:[%s1 + $0x8] sm:$0xff]
    %v37 = vld [vmem:[%s1 + $0x10] sm:$0xff]
    %v38 = vld [vmem:[%s1 + $0x18] sm:$0xff]
    %v39 = vld [vmem:[%s1 + $0x20] sm:$0xff]
    %v40 = vld [vmem:[%s1 + $0x28] sm:$0xff]
    %v41 = vld [vmem:[%s1 + $0x30] sm:$0xff]
    %v42 = vld [vmem:[%s1 + $0x38] sm:$0xff]
    %v43 = vld [vmem:[%s6] sm:$0xff]
    %v44 = vld [vmem:[%s2] sm:$0xff]
    %v45 = vld [vmem:[%s2 + $0x8] sm:$0xff]
    %v46 = vld [vmem:[%s2 + $0x10] sm:$0xff]
    %v47 = vld [vmem:[%s2 + $0x18] sm:$0xff]
    %v48 = vlaneseq
    %v49 = vshrl.u32 %v48, 7
    %v50 = vsub.s32 0, %v49
    %v51 = vrot.slane %v43, %v50
    %vm52 = vcmask 261120
    %v54 = vsel %vm52, %v33, 0
    %v57 = vsel %vm52, %v34, 0
    %59 = vmatprep.subr.mxu0 0.0
    %60 = vmatpush1.msra.mxu0 %v44
    %61 = vmatprep.subr.mxu0 0.0
    %62 = vmatpush1.msra.mxu0 %v45
    %63 = vmatprep.subr.mxu0 0.0
    %64 = vmatpush1.msra.mxu0 %v46
    %65 = vmatprep.subr.mxu0 0.0
    %66 = vmatpush1.msra.mxu0 %v47
    %67 = vmatprep.subr.mxu0 0.0
    %68 = vmatpush1.msra.mxu0 0.0
    %69 = vmatprep.subr.mxu0 0.0
    %70 = vmatpush1.msra.mxu0 0.0
    %71 = vmatprep.subr.mxu0 0.0
    %72 = vmatpush1.msra.mxu0 0.0
    %73 = vmatprep.subr.mxu0 0.0
    %74 = vmatpush1.msra.mxu0 0.0
    %75 = vmatprep.subr.mxu0 0.0
    %76 = vmatpush1.msra.mxu0 0.0
    %77 = vmatprep.subr.mxu0 0.0
    %78 = vmatpush1.msra.mxu0 0.0
    %79 = vmatprep.subr.mxu0 0.0
    %80 = vmatpush1.msra.mxu0 0.0
    %81 = vmatprep.subr.mxu0 0.0
    %82 = vmatpush1.msra.mxu0 0.0
    %83 = vmatprep.subr.mxu0 0.0
    %84 = vmatpush1.msra.mxu0 0.0
    %85 = vmatprep.subr.mxu0 0.0
    %86 = vmatpush1.msra.mxu0 0.0
    %87 = vmatprep.subr.mxu0 0.0
    %88 = vmatpush1.msra.mxu0 0.0
    %89 = vmatprep.subr.mxu0 0.0
    %90 = vmatpush1.msra.mxu0 0.0
    %91 = vmatprep.subr.mxu0 0.0
    %92 = vmatpush1.msra.mxu0 0.0
    %93 = vmatprep.subr.mxu0 0.0
    %94 = vmatpush1.msra.mxu0 0.0
    %95 = vmatprep.subr.mxu0 0.0
    %96 = vmatpush1.msra.mxu0 0.0
    %97 = vmatprep.subr.mxu0 0.0
    %98 = vmatpush1.msra.mxu0 0.0
    %99 = vmatprep.subr.mxu0 0.0
    %100 = vmatpush1.msra.mxu0 0.0
    %101 = vmatprep.subr.mxu0 0.0
    %102 = vmatpush1.msra.mxu0 0.0
    %103 = vmatprep.subr.mxu0 0.0
    %104 = vmatpush1.msra.mxu0 0.0
    %105 = vmatprep.subr.mxu0 0.0
    %106 = vmatpush1.msra.mxu0 0.0
    %107 = vmatprep.subr.mxu0 0.0
    %108 = vmatpush1.msra.mxu0 0.0
    %109 = vmatprep.subr.mxu0 0.0
    %110 = vmatpush1.msra.mxu0 0.0
    %111 = vmatprep.subr.mxu0 0.0
    %112 = vmatpush1.msra.mxu0 0.0
    %113 = vmatprep.subr.mxu0 0.0
    %114 = vmatpush1.msra.mxu0 0.0
    %115 = vmatprep.subr.mxu0 0.0
    %116 = vmatpush1.msra.mxu0 0.0
    %117 = vmatprep.subr.mxu0 0.0
    %118 = vmatpush1.msra.mxu0 0.0
    %119 = vmatprep.subr.mxu0 0.0
    %120 = vmatpush1.msra.mxu0 0.0
    %121 = vmatprep.subr.mxu0 0.0
    %122 = vmatpush1.msra.mxu0 0.0
    %123 = vmatprep.mubr.f32.mxu0 0.0
    %124 = vmatmul.mubr.f32.gmra.mrb[0].mxu0 %v54
    %v125 = vpop.f32.mrb[0].mxu0
    %v126 = vadd.f32 %v51, %v125
    %v127 = vpop.f32.mrb[0].mxu0
    %128 = vmatprep.mubr.f32.mxu0 0.0
    %129 = vmatmul.mubr.f32.gmra.mrb[0].mxu0 %v57
    %v130 = vpop.f32.mrb[0].mxu0
    %v131 = vadd.f32 %v51, %v130
    %v132 = vpop.f32.mrb[0].mxu0
    %133 = vdwg.mxu0
    %136 = vrot.lane.b32.xlu0 %v126, 104
    %v137 = vpop.permute.xlu0 %136
    %138 = vrot.lane.b32.xlu0 %v131, 104
    %v139 = vpop.permute.xlu0 %138
    %140 = vrot.lane.b32.xlu0 %v126, 80
    %v141 = vpop.permute.xlu0 %140
    %142 = vrot.lane.b32.xlu0 %v131, 80
    %v143 = vpop.permute.xlu0 %142
    %144 = vrot.lane.b32.xlu0 %v126, 56
    %v145 = vpop.permute.xlu0 %144
    %146 = vrot.lane.b32.xlu0 %v131, 56
    %v147 = vpop.permute.xlu0 %146
    %148 = vrot.lane.b32.xlu0 %v126, 120
    %v149 = vpop.permute.xlu0 %148
    %150 = vrot.lane.b32.xlu0 %v131, 120
    %v151 = vpop.permute.xlu0 %150
    %152 = vrot.lane.b32.xlu0 %v137, 120
    %v153 = vpop.permute.xlu0 %152
    %154 = vrot.lane.b32.xlu0 %v139, 120
    %v155 = vpop.permute.xlu0 %154
    %156 = vrot.lane.b32.xlu0 %v141, 120
    %v157 = vpop.permute.xlu0 %156
    %158 = vrot.lane.b32.xlu0 %v143, 120
    %v159 = vpop.permute.xlu0 %158
    %160 = vrot.lane.b32.xlu0 %v145, 120
    %v161 = vpop.permute.xlu0 %160
    %162 = vrot.lane.b32.xlu0 %v147, 120
    %v163 = vpop.permute.xlu0 %162
    %vm164 = vcmask 64512
    %v165 = vsel %vm164, %v126, 0
    %v167 = vsel %vm164, %v131, 0
    %v169 = vsel %vm164, %v137, 0
    %v171 = vsel %vm164, %v139, 0
    %v173 = vsel %vm164, %v141, 0
    %v175 = vsel %vm164, %v143, 0
    %v177 = vsel %vm164, %v145, 0
    %v179 = vsel %vm164, %v147, 0
    %v181 = vsel %vm164, %v149, 0
    %v183 = vsel %vm164, %v151, 0
    %v185 = vsel %vm164, %v153, 0
    %v187 = vsel %vm164, %v155, 0
    %v189 = vsel %vm164, %v157, 0
    %v191 = vsel %vm164, %v159, 0
    %v193 = vsel %vm164, %v161, 0
    %v195 = vsel %vm164, %v163, 0
    %197 = vmatprep.subr.mxu0 0.0
    %198 = vmatpush1.xpose.msra.mxu0 %v181
    %199 = vmatprep.subr.mxu0 0.0
    %200 = vmatpush1.xpose.msra.mxu0 %v183
    %201 = vmatprep.subr.mxu0 0.0
    %202 = vmatpush1.xpose.msra.mxu0 %v185
    %203 = vmatprep.subr.mxu0 0.0
    %204 = vmatpush1.xpose.msra.mxu0 %v187
    %205 = vmatprep.subr.mxu0 0.0
    %206 = vmatpush1.xpose.msra.mxu0 %v189
    %207 = vmatprep.subr.mxu0 0.0
    %208 = vmatpush1.xpose.msra.mxu0 %v191
    %209 = vmatprep.subr.mxu0 0.0
    %210 = vmatpush1.xpose.msra.mxu0 %v193
    %211 = vmatprep.subr.mxu0 0.0
    %212 = vmatpush1.xpose.msra.mxu0 %v195
    %213 = vmatprep.subr.mxu0 0.0
    %214 = vmatpush1.xpose.msra.mxu0 0.0
    %215 = vmatprep.subr.mxu0 0.0
    %216 = vmatpush1.xpose.msra.mxu0 0.0
    %217 = vmatprep.subr.mxu0 0.0
    %218 = vmatpush1.xpose.msra.mxu0 0.0
    %219 = vmatprep.subr.mxu0 0.0
    %220 = vmatpush1.xpose.msra.mxu0 0.0
    %221 = vmatprep.subr.mxu0 0.0
    %222 = vmatpush1.xpose.msra.mxu0 0.0
    %223 = vmatprep.subr.mxu0 0.0
    %224 = vmatpush1.xpose.msra.mxu0 0.0
    %225 = vmatprep.subr.mxu0 0.0
    %226 = vmatpush1.xpose.msra.mxu0 0.0
    %227 = vmatprep.subr.mxu0 0.0
    %228 = vmatpush1.xpose.msra.mxu0 0.0
    %229 = vmatprep.subr.mxu0 0.0
    %230 = vmatpush1.xpose.msra.mxu0 0.0
    %231 = vmatprep.subr.mxu0 0.0
    %232 = vmatpush1.xpose.msra.mxu0 0.0
    %233 = vmatprep.subr.mxu0 0.0
    %234 = vmatpush1.xpose.msra.mxu0 0.0
    %235 = vmatprep.subr.mxu0 0.0
    %236 = vmatpush1.xpose.msra.mxu0 0.0
    %237 = vmatprep.subr.mxu0 0.0
    %238 = vmatpush1.xpose.msra.mxu0 0.0
    %239 = vmatprep.subr.mxu0 0.0
    %240 = vmatpush1.xpose.msra.mxu0 0.0
    %241 = vmatprep.subr.mxu0 0.0
    %242 = vmatpush1.xpose.msra.mxu0 0.0
    %243 = vmatprep.subr.mxu0 0.0
    %244 = vmatpush1.xpose.msra.mxu0 0.0
    %245 = vmatprep.subr.mxu0 0.0
    %246 = vmatpush1.xpose.msra.mxu0 0.0
    %247 = vmatprep.subr.mxu0 0.0
    %248 = vmatpush1.xpose.msra.mxu0 0.0
    %249 = vmatprep.subr.mxu0 0.0
    %250 = vmatpush1.xpose.msra.mxu0 0.0
    %251 = vmatprep.subr.mxu0 0.0
    %252 = vmatpush1.xpose.msra.mxu0 0.0
    %253 = vmatprep.subr.mxu0 0.0
    %254 = vmatpush1.xpose.msra.mxu0 0.0
    %255 = vmatprep.subr.mxu0 0.0
    %256 = vmatpush1.xpose.msra.mxu0 0.0
    %257 = vmatprep.subr.mxu0 0.0
    %258 = vmatpush1.xpose.msra.mxu0 0.0
    %259 = vmatprep.subr.mxu0 0.0
    %260 = vmatpush1.xpose.msra.mxu0 0.0
    %261 = vmatprep.mubr.f32.mxu0 0.0
    %262 = vmatmul.mubr.f32.gmra.mrb[0].mxu0 %v165
    %v263 = vpop.f32.mrb[0].mxu0
    %v264 = vadd.f32 %v35, %v263
    %v265 = vpop.f32.mrb[0].mxu0
    %266 = vmatprep.mubr.f32.mxu0 0.0
    %267 = vmatmul.mubr.f32.gmra.mrb[0].mxu0 %v167
    %v268 = vpop.f32.mrb[0].mxu0
    %v269 = vadd.f32 %v36, %v268
    %v270 = vpop.f32.mrb[0].mxu0
    %271 = vmatprep.mubr.f32.mxu0 0.0
    %272 = vmatmul.mubr.f32.gmra.mrb[0].mxu0 %v169
    %v273 = vpop.f32.mrb[0].mxu0
    %v274 = vadd.f32 %v37, %v273
    %v275 = vpop.f32.mrb[0].mxu0
    %276 = vmatprep.mubr.f32.mxu0 0.0
    %277 = vmatmul.mubr.f32.gmra.mrb[0].mxu0 %v171
    %v278 = vpop.f32.mrb[0].mxu0
    %v279 = vadd.f32 %v38, %v278
    %v280 = vpop.f32.mrb[0].mxu0
    %281 = vmatprep.mubr.f32.mxu0 0.0
    %282 = vmatmul.mubr.f32.gmra.mrb[0].mxu0 %v173
    %v283 = vpop.f32.mrb[0].mxu0
    %v284 = vadd.f32 %v39, %v283
    %v285 = vpop.f32.mrb[0].mxu0
    %286 = vmatprep.mubr.f32.mxu0 0.0
    %287 = vmatmul.mubr.f32.gmra.mrb[0].mxu0 %v175
    %v288 = vpop.f32.mrb[0].mxu0
    %v289 = vadd.f32 %v40, %v288
    %v290 = vpop.f32.mrb[0].mxu0
    %291 = vmatprep.mubr.f32.mxu0 0.0
    %292 = vmatmul.mubr.f32.gmra.mrb[0].mxu0 %v177
    %v293 = vpop.f32.mrb[0].mxu0
    %v294 = vadd.f32 %v41, %v293
    %v295 = vpop.f32.mrb[0].mxu0
    %296 = vmatprep.mubr.f32.mxu0 0.0
    %297 = vmatmul.mubr.f32.gmra.mrb[0].mxu0 %v179
    %v298 = vpop.f32.mrb[0].mxu0
    %v299 = vadd.f32 %v42, %v298
    %v300 = vpop.f32.mrb[0].mxu0
    %301 = vdwg.mxu0
    %vm302 = vcmask 523264
    %v303 = vsel %vm302, %v264, -inf
    %304 = vmax.xlane.f32.xlu0 %v303
    %v305 = vpop.xlane.xlu0 %304
    %v306 = vsel %vm302, %v269, -inf
    %307 = vmax.xlane.f32.xlu0 %v306
    %v308 = vpop.xlane.xlu0 %307
    %v309 = vsel %vm302, %v274, -inf
    %310 = vmax.xlane.f32.xlu0 %v309
    %v311 = vpop.xlane.xlu0 %310
    %v312 = vsel %vm302, %v279, -inf
    %313 = vmax.xlane.f32.xlu0 %v312
    %v314 = vpop.xlane.xlu0 %313
    %v315 = vsel %vm302, %v284, -inf
    %316 = vmax.xlane.f32.xlu0 %v315
    %v317 = vpop.xlane.xlu0 %316
    %v318 = vsel %vm302, %v289, -inf
    %319 = vmax.xlane.f32.xlu0 %v318
    %v320 = vpop.xlane.xlu0 %319
    %v321 = vsel %vm302, %v294, -inf
    %322 = vmax.xlane.f32.xlu0 %v321
    %v323 = vpop.xlane.xlu0 %322
    %v324 = vsel %vm302, %v299, -inf
    %325 = vmax.xlane.f32.xlu0 %v324
    %v326 = vpop.xlane.xlu0 %325
    %v327 = vsub.f32 %v264, %v305
    %v328 = vsub.f32 %v269, %v308
    %v329 = vsub.f32 %v274, %v311
    %v330 = vsub.f32 %v279, %v314
    %v331 = vsub.f32 %v284, %v317
    %v332 = vsub.f32 %v289, %v320
    %v333 = vsub.f32 %v294, %v323
    %v334 = vsub.f32 %v299, %v326
    %v335 = vmul.f32 %v327, 1.442695
    %v336 = vpow.pop %v335
    %v337 = vmul.f32 %v328, 1.442695
    %v338 = vpow.pop %v337
    %v339 = vmul.f32 %v329, 1.442695
    %v340 = vpow.pop %v339
    %v341 = vmul.f32 %v330, 1.442695
    %v342 = vpow.pop %v341
    %v343 = vmul.f32 %v331, 1.442695
    %v344 = vpow.pop %v343
    %v345 = vmul.f32 %v332, 1.442695
    %v346 = vpow.pop %v345
    %v347 = vmul.f32 %v333, 1.442695
    %v348 = vpow.pop %v347
    %v349 = vmul.f32 %v334, 1.442695
    %v350 = vpow.pop %v349
    %v351 = vsel %vm302, %v336, 0.0
    %352 = vadd.xlane.f32.xlu0 %v351
    %v353 = vpop.xlane.xlu0 %352
    %v354 = vsel %vm302, %v338, 0.0
    %355 = vadd.xlane.f32.xlu0 %v354
    %v356 = vpop.xlane.xlu0 %355
    %v357 = vsel %vm302, %v340, 0.0
    %358 = vadd.xlane.f32.xlu0 %v357
    %v359 = vpop.xlane.xlu0 %358
    %v360 = vsel %vm302, %v342, 0.0
    %361 = vadd.xlane.f32.xlu0 %v360
    %v362 = vpop.xlane.xlu0 %361
    %v363 = vsel %vm302, %v344, 0.0
    %364 = vadd.xlane.f32.xlu0 %v363
    %v365 = vpop.xlane.xlu0 %364
    %v366 = vsel %vm302, %v346, 0.0
    %367 = vadd.xlane.f32.xlu0 %v366
    %v368 = vpop.xlane.xlu0 %367
    %v369 = vsel %vm302, %v348, 0.0
    %370 = vadd.xlane.f32.xlu0 %v369
    %v371 = vpop.xlane.xlu0 %370
    %v372 = vsel %vm302, %v350, 0.0
    %373 = vadd.xlane.f32.xlu0 %v372
    %v374 = vpop.xlane.xlu0 %373
    %v375 = vrcp.pop %v353
    %v376 = vrcp.pop %v356
    %v377 = vrcp.pop %v359
    %v378 = vrcp.pop %v362
    %v379 = vrcp.pop %v365
    %v380 = vrcp.pop %v368
    %v381 = vrcp.pop %v371
    %v382 = vrcp.pop %v374
    %v383 = vmul.f32 %v336, %v375
    %v384 = vmul.f32 %v338, %v376
    %v385 = vmul.f32 %v340, %v377
    %v386 = vmul.f32 %v342, %v378
    %v387 = vmul.f32 %v344, %v379
    %v388 = vmul.f32 %v346, %v380
    %v389 = vmul.f32 %v348, %v381
    %v390 = vmul.f32 %v350, %v382
    %391 = vrot.lane.b32.xlu0 %v126, 112
    %v392 = vpop.permute.xlu0 %391
    %393 = vrot.lane.b32.xlu0 %v131, 112
    %v394 = vpop.permute.xlu0 %393
    %395 = vrot.lane.b32.xlu0 %v137, 112
    %v396 = vpop.permute.xlu0 %395
    %397 = vrot.lane.b32.xlu0 %v139, 112
    %v398 = vpop.permute.xlu0 %397
    %399 = vrot.lane.b32.xlu0 %v141, 112
    %v400 = vpop.permute.xlu0 %399
    %401 = vrot.lane.b32.xlu0 %v143, 112
    %v402 = vpop.permute.xlu0 %401
    %403 = vrot.lane.b32.xlu0 %v145, 112
    %v404 = vpop.permute.xlu0 %403
    %405 = vrot.lane.b32.xlu0 %v147, 112
    %v406 = vpop.permute.xlu0 %405
    %v416 = vsel %vm302, %v383, 0
    %v419 = vsel %vm302, %v384, 0
    %v422 = vsel %vm302, %v385, 0
    %v425 = vsel %vm302, %v386, 0
    %v428 = vsel %vm302, %v387, 0
    %v431 = vsel %vm302, %v388, 0
    %v434 = vsel %vm302, %v389, 0
    %v437 = vsel %vm302, %v390, 0
    %439 = vmatprep.subr.mxu0 0.0
    %440 = vmatpush1.msra.mxu0 %v392
    %441 = vmatprep.subr.mxu0 0.0
    %442 = vmatpush1.msra.mxu0 %v394
    %443 = vmatprep.subr.mxu0 0.0
    %444 = vmatpush1.msra.mxu0 %v396
    %445 = vmatprep.subr.mxu0 0.0
    %446 = vmatpush1.msra.mxu0 %v398
    %447 = vmatprep.subr.mxu0 0.0
    %448 = vmatpush1.msra.mxu0 %v400
    %449 = vmatprep.subr.mxu0 0.0
    %450 = vmatpush1.msra.mxu0 %v402
    %451 = vmatprep.subr.mxu0 0.0
    %452 = vmatpush1.msra.mxu0 %v404
    %453 = vmatprep.subr.mxu0 0.0
    %454 = vmatpush1.msra.mxu0 %v406
    %455 = vmatprep.subr.mxu0 0.0
    %456 = vmatpush1.msra.mxu0 0.0
    %457 = vmatprep.subr.mxu0 0.0
    %458 = vmatpush1.msra.mxu0 0.0
    %459 = vmatprep.subr.mxu0 0.0
    %460 = vmatpush1.msra.mxu0 0.0
    %461 = vmatprep.subr.mxu0 0.0
    %462 = vmatpush1.msra.mxu0 0.0
    %463 = vmatprep.subr.mxu0 0.0
    %464 = vmatpush1.msra.mxu0 0.0
    %465 = vmatprep.subr.mxu0 0.0
    %466 = vmatpush1.msra.mxu0 0.0
    %467 = vmatprep.subr.mxu0 0.0
    %468 = vmatpush1.msra.mxu0 0.0
    %469 = vmatprep.subr.mxu0 0.0
    %470 = vmatpush1.msra.mxu0 0.0
    %471 = vmatprep.subr.mxu0 0.0
    %472 = vmatpush1.msra.mxu0 0.0
    %473 = vmatprep.subr.mxu0 0.0
    %474 = vmatpush1.msra.mxu0 0.0
    %475 = vmatprep.subr.mxu0 0.0
    %476 = vmatpush1.msra.mxu0 0.0
    %477 = vmatprep.subr.mxu0 0.0
    %478 = vmatpush1.msra.mxu0 0.0
    %479 = vmatprep.subr.mxu0 0.0
    %480 = vmatpush1.msra.mxu0 0.0
    %481 = vmatprep.subr.mxu0 0.0
    %482 = vmatpush1.msra.mxu0 0.0
    %483 = vmatprep.subr.mxu0 0.0
    %484 = vmatpush1.msra.mxu0 0.0
    %485 = vmatprep.subr.mxu0 0.0
    %486 = vmatpush1.msra.mxu0 0.0
    %487 = vmatprep.subr.mxu0 0.0
    %488 = vmatpush1.msra.mxu0 0.0
    %489 = vmatprep.subr.mxu0 0.0
    %490 = vmatpush1.msra.mxu0 0.0
    %491 = vmatprep.subr.mxu0 0.0
    %492 = vmatpush1.msra.mxu0 0.0
    %493 = vmatprep.subr.mxu0 0.0
    %494 = vmatpush1.msra.mxu0 0.0
    %495 = vmatprep.subr.mxu0 0.0
    %496 = vmatpush1.msra.mxu0 0.0
    %497 = vmatprep.subr.mxu0 0.0
    %498 = vmatpush1.msra.mxu0 0.0
    %499 = vmatprep.subr.mxu0 0.0
    %500 = vmatpush1.msra.mxu0 0.0
    %501 = vmatprep.subr.mxu0 0.0
    %502 = vmatpush1.msra.mxu0 0.0
    %503 = vmatprep.mubr.f32.mxu0 0.0
    %504 = vmatmul.mubr.f32.gmra.mrb[0].mxu0 %v416
    %v505 = vpop.f32.mrb[0].mxu0
    %v506 = vadd.f32 0.0, %v505
    %v507 = vpop.f32.mrb[0].mxu0
    %508 = vmatprep.mubr.f32.mxu0 0.0
    %509 = vmatmul.mubr.f32.gmra.mrb[0].mxu0 %v419
    %v510 = vpop.f32.mrb[0].mxu0
    %v511 = vadd.f32 0.0, %v510
    %v512 = vpop.f32.mrb[0].mxu0
    %513 = vmatprep.mubr.f32.mxu0 0.0
    %514 = vmatmul.mubr.f32.gmra.mrb[0].mxu0 %v422
    %v515 = vpop.f32.mrb[0].mxu0
    %v516 = vadd.f32 0.0, %v515
    %v517 = vpop.f32.mrb[0].mxu0
    %518 = vmatprep.mubr.f32.mxu0 0.0
    %519 = vmatmul.mubr.f32.gmra.mrb[0].mxu0 %v425
    %v520 = vpop.f32.mrb[0].mxu0
    %v521 = vadd.f32 0.0, %v520
    %v522 = vpop.f32.mrb[0].mxu0
    %523 = vmatprep.mubr.f32.mxu0 0.0
    %524 = vmatmul.mubr.f32.gmra.mrb[0].mxu0 %v428
    %v525 = vpop.f32.mrb[0].mxu0
    %v526 = vadd.f32 0.0, %v525
    %v527 = vpop.f32.mrb[0].mxu0
    %528 = vmatprep.mubr.f32.mxu0 0.0
    %529 = vmatmul.mubr.f32.gmra.mrb[0].mxu0 %v431
    %v530 = vpop.f32.mrb[0].mxu0
    %v531 = vadd.f32 0.0, %v530
    %v532 = vpop.f32.mrb[0].mxu0
    %533 = vmatprep.mubr.f32.mxu0 0.0
    %534 = vmatmul.mubr.f32.gmra.mrb[0].mxu0 %v434
    %v535 = vpop.f32.mrb[0].mxu0
    %v536 = vadd.f32 0.0, %v535
    %v537 = vpop.f32.mrb[0].mxu0
    %538 = vmatprep.mubr.f32.mxu0 0.0
    %539 = vmatmul.mubr.f32.gmra.mrb[0].mxu0 %v437
    %v540 = vpop.f32.mrb[0].mxu0
    %v541 = vadd.f32 0.0, %v540
    %v542 = vpop.f32.mrb[0].mxu0
    %543 = vdwg.mxu0
    %546 = vrot.lane.b32.xlu0 %v516, 8
    %v547 = vpop.permute.xlu0 %546
    %548 = vrot.lane.b32.xlu0 %v521, 8
    %v549 = vpop.permute.xlu0 %548
    %554 = vrot.lane.b32.xlu0 %v526, 16
    %v555 = vpop.permute.xlu0 %554
    %556 = vrot.lane.b32.xlu0 %v531, 16
    %v557 = vpop.permute.xlu0 %556
    %562 = vrot.lane.b32.xlu0 %v536, 24
    %v563 = vpop.permute.xlu0 %562
    %564 = vrot.lane.b32.xlu0 %v541, 24
    %v565 = vpop.permute.xlu0 %564
    %v568 = vsel %vm164, %v506, %v547
    %v569 = vsel %vm164, %v511, %v549
    %vm570 = vcmask 130048
    %v571 = vsel %vm570, %v568, %v555
    %v572 = vsel %vm570, %v569, %v557
    %vm573 = vcmask 195584
    %v574 = vsel %vm573, %v571, %v563
    %v575 = vsel %vm573, %v572, %v565
    %v576 = vld [vmem:[%s3] sm:$0xff]
    %v577 = vld [vmem:[%s3 + $0x8] sm:$0xff]
    %v578 = vld [vmem:[%s3 + $0x10] sm:$0xff]
    %v579 = vld [vmem:[%s3 + $0x18] sm:$0xff]
    %v580 = vlaneseq
    %v581 = vshrl.u32 %v580, 7
    %v582 = vsub.s32 1, %v581
    %v583 = vrot.slane %v43, %v582
    %v585 = vsel %vm52, %v574, 0
    %v588 = vsel %vm52, %v575, 0
    %590 = vmatprep.subr.mxu0 0.0
    %591 = vmatpush1.msra.mxu0 %v576
    %592 = vmatprep.subr.mxu0 0.0
    %593 = vmatpush1.msra.mxu0 %v577
    %594 = vmatprep.subr.mxu0 0.0
    %595 = vmatpush1.msra.mxu0 %v578
    %596 = vmatprep.subr.mxu0 0.0
    %597 = vmatpush1.msra.mxu0 %v579
    %598 = vmatprep.subr.mxu0 0.0
    %599 = vmatpush1.msra.mxu0 0.0
    %600 = vmatprep.subr.mxu0 0.0
    %601 = vmatpush1.msra.mxu0 0.0
    %602 = vmatprep.subr.mxu0 0.0
    %603 = vmatpush1.msra.mxu0 0.0
    %604 = vmatprep.subr.mxu0 0.0
    %605 = vmatpush1.msra.mxu0 0.0
    %606 = vmatprep.subr.mxu0 0.0
    %607 = vmatpush1.msra.mxu0 0.0
    %608 = vmatprep.subr.mxu0 0.0
    %609 = vmatpush1.msra.mxu0 0.0
    %610 = vmatprep.subr.mxu0 0.0
    %611 = vmatpush1.msra.mxu0 0.0
    %612 = vmatprep.subr.mxu0 0.0
    %613 = vmatpush1.msra.mxu0 0.0
    %614 = vmatprep.subr.mxu0 0.0
    %615 = vmatpush1.msra.mxu0 0.0
    %616 = vmatprep.subr.mxu0 0.0
    %617 = vmatpush1.msra.mxu0 0.0
    %618 = vmatprep.subr.mxu0 0.0
    %619 = vmatpush1.msra.mxu0 0.0
    %620 = vmatprep.subr.mxu0 0.0
    %621 = vmatpush1.msra.mxu0 0.0
    %622 = vmatprep.subr.mxu0 0.0
    %623 = vmatpush1.msra.mxu0 0.0
    %624 = vmatprep.subr.mxu0 0.0
    %625 = vmatpush1.msra.mxu0 0.0
    %626 = vmatprep.subr.mxu0 0.0
    %627 = vmatpush1.msra.mxu0 0.0
    %628 = vmatprep.subr.mxu0 0.0
    %629 = vmatpush1.msra.mxu0 0.0
    %630 = vmatprep.subr.mxu0 0.0
    %631 = vmatpush1.msra.mxu0 0.0
    %632 = vmatprep.subr.mxu0 0.0
    %633 = vmatpush1.msra.mxu0 0.0
    %634 = vmatprep.subr.mxu0 0.0
    %635 = vmatpush1.msra.mxu0 0.0
    %636 = vmatprep.subr.mxu0 0.0
    %637 = vmatpush1.msra.mxu0 0.0
    %638 = vmatprep.subr.mxu0 0.0
    %639 = vmatpush1.msra.mxu0 0.0
    %640 = vmatprep.subr.mxu0 0.0
    %641 = vmatpush1.msra.mxu0 0.0
    %642 = vmatprep.subr.mxu0 0.0
    %643 = vmatpush1.msra.mxu0 0.0
    %644 = vmatprep.subr.mxu0 0.0
    %645 = vmatpush1.msra.mxu0 0.0
    %646 = vmatprep.subr.mxu0 0.0
    %647 = vmatpush1.msra.mxu0 0.0
    %648 = vmatprep.subr.mxu0 0.0
    %649 = vmatpush1.msra.mxu0 0.0
    %650 = vmatprep.subr.mxu0 0.0
    %651 = vmatpush1.msra.mxu0 0.0
    %652 = vmatprep.subr.mxu0 0.0
    %653 = vmatpush1.msra.mxu0 0.0
    %654 = vmatprep.mubr.f32.mxu0 0.0
    %655 = vmatmul.mubr.f32.gmra.mrb[0].mxu0 %v585
    %v656 = vpop.f32.mrb[0].mxu0
    %v657 = vadd.f32 %v583, %v656
    %v658 = vpop.f32.mrb[0].mxu0
    %659 = vmatprep.mubr.f32.mxu0 0.0
    %660 = vmatmul.mubr.f32.gmra.mrb[0].mxu0 %v588
    %v661 = vpop.f32.mrb[0].mxu0
    %v662 = vadd.f32 %v583, %v661
    %v663 = vpop.f32.mrb[0].mxu0
    %664 = vdwg.mxu0
    %v665 = vadd.f32 %v33, %v657
    %v666 = vadd.f32 %v34, %v662
    %v667 = vsel %vm52, %v665, 0.0
    %668 = vadd.xlane.f32.xlu0 %v667
    %v669 = vpop.xlane.xlu0 %668
    %v670 = vsel %vm52, %v666, 0.0
    %671 = vadd.xlane.f32.xlu0 %v670
    %v672 = vpop.xlane.xlu0 %671
    %v673 = vrcp.pop 32.0
    %v674 = vmul.f32 %v669, %v673
    %v675 = vmul.f32 %v672, %v673
    %v676 = vsub.f32 %v665, %v674
    %v677 = vsub.f32 %v666, %v675
    %v678 = vmul.f32 %v676, %v676
    %v679 = vmul.f32 %v677, %v677
    %v680 = vsel %vm52, %v678, 0.0
    %681 = vadd.xlane.f32.xlu0 %v680
    %v682 = vpop.xlane.xlu0 %681
    %v683 = vsel %vm52, %v679, 0.0
    %684 = vadd.xlane.f32.xlu0 %v683
    %v685 = vpop.xlane.xlu0 %684
    %v686 = vmul.f32 %v682, %v673
    %v687 = vmul.f32 %v685, %v673
    %v688 = vadd.f32 %v686, 1e-12
    %v689 = vadd.f32 %v687, 1e-12
    %v690 = vrsqrt.pop %v688
    %v691 = vrsqrt.pop %v689
    %v692 = vmul.f32 %v676, %v690
    %v693 = vmul.f32 %v677, %v691
    %v694 = vlaneseq
    %v695 = vshrl.u32 %v694, 7
    %v696 = vsub.s32 2, %v695
    %v697 = vrot.slane %v43, %v696
    %v698 = vmul.f32 %v692, %v697
    %v699 = vmul.f32 %v693, %v697
    %v700 = vlaneseq
    %v701 = vshrl.u32 %v700, 7
    %v702 = vsub.s32 3, %v701
    %v703 = vrot.slane %v43, %v702
    %v704 = vadd.f32 %v698, %v703
    %v705 = vadd.f32 %v699, %v703
    %v706 = vld [vmem:[%s4] sm:$0xff]
    %v707 = vld [vmem:[%s4 + $0x8] sm:$0xff]
    %v708 = vld [vmem:[%s4 + $0x10] sm:$0xff]
    %v709 = vld [vmem:[%s4 + $0x18] sm:$0xff]
    %v710 = vlaneseq
    %v711 = vshrl.u32 %v710, 7
    %v712 = vsub.s32 4, %v711
    %v713 = vrot.slane %v43, %v712
    %v715 = vsel %vm52, %v704, 0
    %v718 = vsel %vm52, %v705, 0
    %720 = vmatprep.subr.mxu0 0.0
    %721 = vmatpush1.msra.mxu0 %v706
    %722 = vmatprep.subr.mxu0 0.0
    %723 = vmatpush1.msra.mxu0 %v707
    %724 = vmatprep.subr.mxu0 0.0
    %725 = vmatpush1.msra.mxu0 %v708
    %726 = vmatprep.subr.mxu0 0.0
    %727 = vmatpush1.msra.mxu0 %v709
    %728 = vmatprep.subr.mxu0 0.0
    %729 = vmatpush1.msra.mxu0 0.0
    %730 = vmatprep.subr.mxu0 0.0
    %731 = vmatpush1.msra.mxu0 0.0
    %732 = vmatprep.subr.mxu0 0.0
    %733 = vmatpush1.msra.mxu0 0.0
    %734 = vmatprep.subr.mxu0 0.0
    %735 = vmatpush1.msra.mxu0 0.0
    %736 = vmatprep.subr.mxu0 0.0
    %737 = vmatpush1.msra.mxu0 0.0
    %738 = vmatprep.subr.mxu0 0.0
    %739 = vmatpush1.msra.mxu0 0.0
    %740 = vmatprep.subr.mxu0 0.0
    %741 = vmatpush1.msra.mxu0 0.0
    %742 = vmatprep.subr.mxu0 0.0
    %743 = vmatpush1.msra.mxu0 0.0
    %744 = vmatprep.subr.mxu0 0.0
    %745 = vmatpush1.msra.mxu0 0.0
    %746 = vmatprep.subr.mxu0 0.0
    %747 = vmatpush1.msra.mxu0 0.0
    %748 = vmatprep.subr.mxu0 0.0
    %749 = vmatpush1.msra.mxu0 0.0
    %750 = vmatprep.subr.mxu0 0.0
    %751 = vmatpush1.msra.mxu0 0.0
    %752 = vmatprep.subr.mxu0 0.0
    %753 = vmatpush1.msra.mxu0 0.0
    %754 = vmatprep.subr.mxu0 0.0
    %755 = vmatpush1.msra.mxu0 0.0
    %756 = vmatprep.subr.mxu0 0.0
    %757 = vmatpush1.msra.mxu0 0.0
    %758 = vmatprep.subr.mxu0 0.0
    %759 = vmatpush1.msra.mxu0 0.0
    %760 = vmatprep.subr.mxu0 0.0
    %761 = vmatpush1.msra.mxu0 0.0
    %762 = vmatprep.subr.mxu0 0.0
    %763 = vmatpush1.msra.mxu0 0.0
    %764 = vmatprep.subr.mxu0 0.0
    %765 = vmatpush1.msra.mxu0 0.0
    %766 = vmatprep.subr.mxu0 0.0
    %767 = vmatpush1.msra.mxu0 0.0
    %768 = vmatprep.subr.mxu0 0.0
    %769 = vmatpush1.msra.mxu0 0.0
    %770 = vmatprep.subr.mxu0 0.0
    %771 = vmatpush1.msra.mxu0 0.0
    %772 = vmatprep.subr.mxu0 0.0
    %773 = vmatpush1.msra.mxu0 0.0
    %774 = vmatprep.subr.mxu0 0.0
    %775 = vmatpush1.msra.mxu0 0.0
    %776 = vmatprep.subr.mxu0 0.0
    %777 = vmatpush1.msra.mxu0 0.0
    %778 = vmatprep.subr.mxu0 0.0
    %779 = vmatpush1.msra.mxu0 0.0
    %780 = vmatprep.subr.mxu0 0.0
    %781 = vmatpush1.msra.mxu0 0.0
    %782 = vmatprep.subr.mxu0 0.0
    %783 = vmatpush1.msra.mxu0 0.0
    %784 = vmatprep.mubr.f32.mxu0 0.0
    %785 = vmatmul.mubr.f32.gmra.mrb[0].mxu0 %v715
    %v786 = vpop.f32.mrb[0].mxu0
    %v787 = vadd.f32 %v713, %v786
    %v788 = vpop.f32.mrb[0].mxu0
    %789 = vmatprep.mubr.f32.mxu0 0.0
    %790 = vmatmul.mubr.f32.gmra.mrb[0].mxu0 %v718
    %v791 = vpop.f32.mrb[0].mxu0
    %v792 = vadd.f32 %v713, %v791
    %v793 = vpop.f32.mrb[0].mxu0
    %794 = vdwg.mxu0
    %v795 = vmul.f32 %v787, 0.5
    %v796 = vmul.f32 %v792, 0.5
    %v797 = vmul.f32 %v787, 0.044715
    %v798 = vmul.f32 %v792, 0.044715
    %v799 = vmul.f32 %v797, %v787
    %v800 = vmul.f32 %v798, %v792
    %v801 = vmul.f32 %v799, %v787
    %v802 = vmul.f32 %v800, %v792
    %v803 = vadd.f32 %v787, %v801
    %v804 = vadd.f32 %v792, %v802
    %v805 = vmul.f32 %v803, 0.7978846
    %v806 = vmul.f32 %v804, 0.7978846
    %v807 = vtanh.pop %v805
    %v808 = vtanh.pop %v806
    %v809 = vadd.f32 %v807, 1.0
    %v810 = vadd.f32 %v808, 1.0
    %v811 = vmul.f32 %v795, %v809
    %v812 = vmul.f32 %v796, %v810
    %v813 = vld [vmem:[%s5] sm:$0xff]
    %v814 = vld [vmem:[%s5 + $0x8] sm:$0xff]
    %v815 = vld [vmem:[%s5 + $0x10] sm:$0xff]
    %v816 = vld [vmem:[%s5 + $0x18] sm:$0xff]
    %v817 = vld [vmem:[%s5 + $0x20] sm:$0xff]
    %v818 = vld [vmem:[%s5 + $0x28] sm:$0xff]
    %v819 = vld [vmem:[%s5 + $0x30] sm:$0xff]
    %v820 = vld [vmem:[%s5 + $0x38] sm:$0xff]
    %v821 = vlaneseq
    %v822 = vshrl.u32 %v821, 7
    %v823 = vsub.s32 5, %v822
    %v824 = vrot.slane %v43, %v823
    %v826 = vsel %vm302, %v811, 0
    %v829 = vsel %vm302, %v812, 0
    %831 = vmatprep.subr.mxu0 0.0
    %832 = vmatpush1.msra.mxu0 %v813
    %833 = vmatprep.subr.mxu0 0.0
    %834 = vmatpush1.msra.mxu0 %v814
    %835 = vmatprep.subr.mxu0 0.0
    %836 = vmatpush1.msra.mxu0 %v815
    %837 = vmatprep.subr.mxu0 0.0
    %838 = vmatpush1.msra.mxu0 %v816
    %839 = vmatprep.subr.mxu0 0.0
    %840 = vmatpush1.msra.mxu0 %v817
    %841 = vmatprep.subr.mxu0 0.0
    %842 = vmatpush1.msra.mxu0 %v818
    %843 = vmatprep.subr.mxu0 0.0
    %844 = vmatpush1.msra.mxu0 %v819
    %845 = vmatprep.subr.mxu0 0.0
    %846 = vmatpush1.msra.mxu0 %v820
    %847 = vmatprep.subr.mxu0 0.0
    %848 = vmatpush1.msra.mxu0 0.0
    %849 = vmatprep.subr.mxu0 0.0
    %850 = vmatpush1.msra.mxu0 0.0
    %851 = vmatprep.subr.mxu0 0.0
    %852 = vmatpush1.msra.mxu0 0.0
    %853 = vmatprep.subr.mxu0 0.0
    %854 = vmatpush1.msra.mxu0 0.0
    %855 = vmatprep.subr.mxu0 0.0
    %856 = vmatpush1.msra.mxu0 0.0
    %857 = vmatprep.subr.mxu0 0.0
    %858 = vmatpush1.msra.mxu0 0.0
    %859 = vmatprep.subr.mxu0 0.0
    %860 = vmatpush1.msra.mxu0 0.0
    %861 = vmatprep.subr.mxu0 0.0
    %862 = vmatpush1.msra.mxu0 0.0
    %863 = vmatprep.subr.mxu0 0.0
    %864 = vmatpush1.msra.mxu0 0.0
    %865 = vmatprep.subr.mxu0 0.0
    %866 = vmatpush1.msra.mxu0 0.0
    %867 = vmatprep.subr.mxu0 0.0
    %868 = vmatpush1.msra.mxu0 0.0
    %869 = vmatprep.subr.mxu0 0.0
    %870 = vmatpush1.msra.mxu0 0.0
    %871 = vmatprep.subr.mxu0 0.0
    %872 = vmatpush1.msra.mxu0 0.0
    %873 = vmatprep.subr.mxu0 0.0
    %874 = vmatpush1.msra.mxu0 0.0
    %875 = vmatprep.subr.mxu0 0.0
    %876 = vmatpush1.msra.mxu0 0.0
    %877 = vmatprep.subr.mxu0 0.0
    %878 = vmatpush1.msra.mxu0 0.0
    %879 = vmatprep.subr.mxu0 0.0
    %880 = vmatpush1.msra.mxu0 0.0
    %881 = vmatprep.subr.mxu0 0.0
    %882 = vmatpush1.msra.mxu0 0.0
    %883 = vmatprep.subr.mxu0 0.0
    %884 = vmatpush1.msra.mxu0 0.0
    %885 = vmatprep.subr.mxu0 0.0
    %886 = vmatpush1.msra.mxu0 0.0
    %887 = vmatprep.subr.mxu0 0.0
    %888 = vmatpush1.msra.mxu0 0.0
    %889 = vmatprep.subr.mxu0 0.0
    %890 = vmatpush1.msra.mxu0 0.0
    %891 = vmatprep.subr.mxu0 0.0
    %892 = vmatpush1.msra.mxu0 0.0
    %893 = vmatprep.subr.mxu0 0.0
    %894 = vmatpush1.msra.mxu0 0.0
    %895 = vmatprep.mubr.f32.mxu0 0.0
    %896 = vmatmul.mubr.f32.gmra.mrb[0].mxu0 %v826
    %v897 = vpop.f32.mrb[0].mxu0
    %v898 = vadd.f32 %v824, %v897
    %v899 = vpop.f32.mrb[0].mxu0
    %900 = vmatprep.mubr.f32.mxu0 0.0
    %901 = vmatmul.mubr.f32.gmra.mrb[0].mxu0 %v829
    %v902 = vpop.f32.mrb[0].mxu0
    %v903 = vadd.f32 %v824, %v902
    %v904 = vpop.f32.mrb[0].mxu0
    %905 = vdwg.mxu0
    %v906 = vadd.f32 %v704, %v898
    %v907 = vadd.f32 %v705, %v903
    %v908 = vsel %vm52, %v906, 0.0
    %909 = vadd.xlane.f32.xlu0 %v908
    %v910 = vpop.xlane.xlu0 %909
    %v911 = vsel %vm52, %v907, 0.0
    %912 = vadd.xlane.f32.xlu0 %v911
    %v913 = vpop.xlane.xlu0 %912
    %v914 = vmul.f32 %v910, %v673
    %v915 = vmul.f32 %v913, %v673
    %v916 = vsub.f32 %v906, %v914
    %v917 = vsub.f32 %v907, %v915
    %v918 = vmul.f32 %v916, %v916
    %v919 = vmul.f32 %v917, %v917
    %v920 = vsel %vm52, %v918, 0.0
    %921 = vadd.xlane.f32.xlu0 %v920
    %v922 = vpop.xlane.xlu0 %921
    %v923 = vsel %vm52, %v919, 0.0
    %924 = vadd.xlane.f32.xlu0 %v923
    %v925 = vpop.xlane.xlu0 %924
    %v926 = vmul.f32 %v922, %v673
    %v927 = vmul.f32 %v925, %v673
    %v928 = vadd.f32 %v926, 1e-12
    %v929 = vadd.f32 %v927, 1e-12
    %v930 = vrsqrt.pop %v928
    %v931 = vrsqrt.pop %v929
    %v932 = vmul.f32 %v916, %v930
    %v933 = vmul.f32 %v917, %v931
    %v934 = vlaneseq
    %v935 = vshrl.u32 %v934, 7
    %v936 = vsub.s32 6, %v935
    %v937 = vrot.slane %v43, %v936
    %v938 = vmul.f32 %v932, %v937
    %v939 = vmul.f32 %v933, %v937
    %v940 = vlaneseq
    %v941 = vshrl.u32 %v940, 7
    %v942 = vsub.s32 7, %v941
    %v943 = vrot.slane %v43, %v942
    %v944 = vadd.f32 %v938, %v943
    %v945 = vadd.f32 %v939, %v943
    %s946 = scalar_lea.vmem %s6, 8
    %v947 = vld [vmem:[%s946] sm:$0xff]
    %s948 = scalar_lea.vmem %s2, 32
    %v949 = vld [vmem:[%s948] sm:$0xff]
    %v950 = vld [vmem:[%s948 + $0x8] sm:$0xff]
    %v951 = vld [vmem:[%s948 + $0x10] sm:$0xff]
    %v952 = vld [vmem:[%s948 + $0x18] sm:$0xff]
    %v953 = vlaneseq
    %v954 = vshrl.u32 %v953, 7
    %v955 = vsub.s32 0, %v954
    %v956 = vrot.slane %v947, %v955
    %v958 = vsel %vm52, %v944, 0
    %v961 = vsel %vm52, %v945, 0
    %963 = vmatprep.subr.mxu0 0.0
    %964 = vmatpush1.msra.mxu0 %v949
    %965 = vmatprep.subr.mxu0 0.0
    %966 = vmatpush1.msra.mxu0 %v950
    %967 = vmatprep.subr.mxu0 0.0
    %968 = vmatpush1.msra.mxu0 %v951
    %969 = vmatprep.subr.mxu0 0.0
    %970 = vmatpush1.msra.mxu0 %v952
    %971 = vmatprep.subr.mxu0 0.0
    %972 = vmatpush1.msra.mxu0 0.0
    %973 = vmatprep.subr.mxu0 0.0
    %974 = vmatpush1.msra.mxu0 0.0
    %975 = vmatprep.subr.mxu0 0.0
    %976 = vmatpush1.msra.mxu0 0.0
    %977 = vmatprep.subr.mxu0 0.0
    %978 = vmatpush1.msra.mxu0 0.0
    %979 = vmatprep.subr.mxu0 0.0
    %980 = vmatpush1.msra.mxu0 0.0
    %981 = vmatprep.subr.mxu0 0.0
    %982 = vmatpush1.msra.mxu0 0.0
    %983 = vmatprep.subr.mxu0 0.0
    %984 = vmatpush1.msra.mxu0 0.0
    %985 = vmatprep.subr.mxu0 0.0
    %986 = vmatpush1.msra.mxu0 0.0
    %987 = vmatprep.subr.mxu0 0.0
    %988 = vmatpush1.msra.mxu0 0.0
    %989 = vmatprep.subr.mxu0 0.0
    %990 = vmatpush1.msra.mxu0 0.0
    %991 = vmatprep.subr.mxu0 0.0
    %992 = vmatpush1.msra.mxu0 0.0
    %993 = vmatprep.subr.mxu0 0.0
    %994 = vmatpush1.msra.mxu0 0.0
    %995 = vmatprep.subr.mxu0 0.0
    %996 = vmatpush1.msra.mxu0 0.0
    %997 = vmatprep.subr.mxu0 0.0
    %998 = vmatpush1.msra.mxu0 0.0
    %999 = vmatprep.subr.mxu0 0.0
    %1000 = vmatpush1.msra.mxu0 0.0
    %1001 = vmatprep.subr.mxu0 0.0
    %1002 = vmatpush1.msra.mxu0 0.0
    %1003 = vmatprep.subr.mxu0 0.0
    %1004 = vmatpush1.msra.mxu0 0.0
    %1005 = vmatprep.subr.mxu0 0.0
    %1006 = vmatpush1.msra.mxu0 0.0
    %1007 = vmatprep.subr.mxu0 0.0
    %1008 = vmatpush1.msra.mxu0 0.0
    %1009 = vmatprep.subr.mxu0 0.0
    %1010 = vmatpush1.msra.mxu0 0.0
    %1011 = vmatprep.subr.mxu0 0.0
    %1012 = vmatpush1.msra.mxu0 0.0
    %1013 = vmatprep.subr.mxu0 0.0
    %1014 = vmatpush1.msra.mxu0 0.0
    %1015 = vmatprep.subr.mxu0 0.0
    %1016 = vmatpush1.msra.mxu0 0.0
    %1017 = vmatprep.subr.mxu0 0.0
    %1018 = vmatpush1.msra.mxu0 0.0
    %1019 = vmatprep.subr.mxu0 0.0
    %1020 = vmatpush1.msra.mxu0 0.0
    %1021 = vmatprep.subr.mxu0 0.0
    %1022 = vmatpush1.msra.mxu0 0.0
    %1023 = vmatprep.subr.mxu0 0.0
    %1024 = vmatpush1.msra.mxu0 0.0
    %1025 = vmatprep.subr.mxu0 0.0
    %1026 = vmatpush1.msra.mxu0 0.0
    %1027 = vmatprep.mubr.f32.mxu0 0.0
    %1028 = vmatmul.mubr.f32.gmra.mrb[0].mxu0 %v958
    %v1029 = vpop.f32.mrb[0].mxu0
    %v1030 = vadd.f32 %v956, %v1029
    %v1031 = vpop.f32.mrb[0].mxu0
    %1032 = vmatprep.mubr.f32.mxu0 0.0
    %1033 = vmatmul.mubr.f32.gmra.mrb[0].mxu0 %v961
    %v1034 = vpop.f32.mrb[0].mxu0
    %v1035 = vadd.f32 %v956, %v1034
    %v1036 = vpop.f32.mrb[0].mxu0
    %1037 = vdwg.mxu0
    %1040 = vrot.lane.b32.xlu0 %v1030, 104
    %v1041 = vpop.permute.xlu0 %1040
    %1042 = vrot.lane.b32.xlu0 %v1035, 104
    %v1043 = vpop.permute.xlu0 %1042
    %1044 = vrot.lane.b32.xlu0 %v1030, 80
    %v1045 = vpop.permute.xlu0 %1044
    %1046 = vrot.lane.b32.xlu0 %v1035, 80
    %v1047 = vpop.permute.xlu0 %1046
    %1048 = vrot.lane.b32.xlu0 %v1030, 56
    %v1049 = vpop.permute.xlu0 %1048
    %1050 = vrot.lane.b32.xlu0 %v1035, 56
    %v1051 = vpop.permute.xlu0 %1050
    %1052 = vrot.lane.b32.xlu0 %v1030, 120
    %v1053 = vpop.permute.xlu0 %1052
    %1054 = vrot.lane.b32.xlu0 %v1035, 120
    %v1055 = vpop.permute.xlu0 %1054
    %1056 = vrot.lane.b32.xlu0 %v1041, 120
    %v1057 = vpop.permute.xlu0 %1056
    %1058 = vrot.lane.b32.xlu0 %v1043, 120
    %v1059 = vpop.permute.xlu0 %1058
    %1060 = vrot.lane.b32.xlu0 %v1045, 120
    %v1061 = vpop.permute.xlu0 %1060
    %1062 = vrot.lane.b32.xlu0 %v1047, 120
    %v1063 = vpop.permute.xlu0 %1062
    %1064 = vrot.lane.b32.xlu0 %v1049, 120
    %v1065 = vpop.permute.xlu0 %1064
    %1066 = vrot.lane.b32.xlu0 %v1051, 120
    %v1067 = vpop.permute.xlu0 %1066
    %v1068 = vsel %vm164, %v1030, 0
    %v1070 = vsel %vm164, %v1035, 0
    %v1072 = vsel %vm164, %v1041, 0
    %v1074 = vsel %vm164, %v1043, 0
    %v1076 = vsel %vm164, %v1045, 0
    %v1078 = vsel %vm164, %v1047, 0
    %v1080 = vsel %vm164, %v1049, 0
    %v1082 = vsel %vm164, %v1051, 0
    %v1084 = vsel %vm164, %v1053, 0
    %v1086 = vsel %vm164, %v1055, 0
    %v1088 = vsel %vm164, %v1057, 0
    %v1090 = vsel %vm164, %v1059, 0
    %v1092 = vsel %vm164, %v1061, 0
    %v1094 = vsel %vm164, %v1063, 0
    %v1096 = vsel %vm164, %v1065, 0
    %v1098 = vsel %vm164, %v1067, 0
    %1100 = vmatprep.subr.mxu0 0.0
    %1101 = vmatpush1.xpose.msra.mxu0 %v1084
    %1102 = vmatprep.subr.mxu0 0.0
    %1103 = vmatpush1.xpose.msra.mxu0 %v1086
    %1104 = vmatprep.subr.mxu0 0.0
    %1105 = vmatpush1.xpose.msra.mxu0 %v1088
    %1106 = vmatprep.subr.mxu0 0.0
    %1107 = vmatpush1.xpose.msra.mxu0 %v1090
    %1108 = vmatprep.subr.mxu0 0.0
    %1109 = vmatpush1.xpose.msra.mxu0 %v1092
    %1110 = vmatprep.subr.mxu0 0.0
    %1111 = vmatpush1.xpose.msra.mxu0 %v1094
    %1112 = vmatprep.subr.mxu0 0.0
    %1113 = vmatpush1.xpose.msra.mxu0 %v1096
    %1114 = vmatprep.subr.mxu0 0.0
    %1115 = vmatpush1.xpose.msra.mxu0 %v1098
    %1116 = vmatprep.subr.mxu0 0.0
    %1117 = vmatpush1.xpose.msra.mxu0 0.0
    %1118 = vmatprep.subr.mxu0 0.0
    %1119 = vmatpush1.xpose.msra.mxu0 0.0
    %1120 = vmatprep.subr.mxu0 0.0
    %1121 = vmatpush1.xpose.msra.mxu0 0.0
    %1122 = vmatprep.subr.mxu0 0.0
    %1123 = vmatpush1.xpose.msra.mxu0 0.0
    %1124 = vmatprep.subr.mxu0 0.0
    %1125 = vmatpush1.xpose.msra.mxu0 0.0
    %1126 = vmatprep.subr.mxu0 0.0
    %1127 = vmatpush1.xpose.msra.mxu0 0.0
    %1128 = vmatprep.subr.mxu0 0.0
    %1129 = vmatpush1.xpose.msra.mxu0 0.0
    %1130 = vmatprep.subr.mxu0 0.0
    %1131 = vmatpush1.xpose.msra.mxu0 0.0
    %1132 = vmatprep.subr.mxu0 0.0
    %1133 = vmatpush1.xpose.msra.mxu0 0.0
    %1134 = vmatprep.subr.mxu0 0.0
    %1135 = vmatpush1.xpose.msra.mxu0 0.0
    %1136 = vmatprep.subr.mxu0 0.0
    %1137 = vmatpush1.xpose.msra.mxu0 0.0
    %1138 = vmatprep.subr.mxu0 0.0
    %1139 = vmatpush1.xpose.msra.mxu0 0.0
    %1140 = vmatprep.subr.mxu0 0.0
    %1141 = vmatpush1.xpose.msra.mxu0 0.0
    %1142 = vmatprep.subr.mxu0 0.0
    %1143 = vmatpush1.xpose.msra.mxu0 0.0
    %1144 = vmatprep.subr.mxu0 0.0
    %1145 = vmatpush1.xpose.msra.mxu0 0.0
    %1146 = vmatprep.subr.mxu0 0.0
    %1147 = vmatpush1.xpose.msra.mxu0 0.0
    %1148 = vmatprep.subr.mxu0 0.0
    %1149 = vmatpush1.xpose.msra.mxu0 0.0
    %1150 = vmatprep.subr.mxu0 0.0
    %1151 = vmatpush1.xpose.msra.mxu0 0.0
    %1152 = vmatprep.subr.mxu0 0.0
    %1153 = vmatpush1.xpose.msra.mxu0 0.0
    %1154 = vmatprep.subr.mxu0 0.0
    %1155 = vmatpush1.xpose.msra.mxu0 0.0
    %1156 = vmatprep.subr.mxu0 0.0
    %1157 = vmatpush1.xpose.msra.mxu0 0.0
    %1158 = vmatprep.subr.mxu0 0.0
    %1159 = vmatpush1.xpose.msra.mxu0 0.0
    %1160 = vmatprep.subr.mxu0 0.0
    %1161 = vmatpush1.xpose.msra.mxu0 0.0
    %1162 = vmatprep.subr.mxu0 0.0
    %1163 = vmatpush1.xpose.msra.mxu0 0.0
    %1164 = vmatprep.mubr.f32.mxu0 0.0
    %1165 = vmatmul.mubr.f32.gmra.mrb[0].mxu0 %v1068
    %v1166 = vpop.f32.mrb[0].mxu0
    %v1167 = vadd.f32 %v35, %v1166
    %v1168 = vpop.f32.mrb[0].mxu0
    %1169 = vmatprep.mubr.f32.mxu0 0.0
    %1170 = vmatmul.mubr.f32.gmra.mrb[0].mxu0 %v1070
    %v1171 = vpop.f32.mrb[0].mxu0
    %v1172 = vadd.f32 %v36, %v1171
    %v1173 = vpop.f32.mrb[0].mxu0
    %1174 = vmatprep.mubr.f32.mxu0 0.0
    %1175 = vmatmul.mubr.f32.gmra.mrb[0].mxu0 %v1072
    %v1176 = vpop.f32.mrb[0].mxu0
    %v1177 = vadd.f32 %v37, %v1176
    %v1178 = vpop.f32.mrb[0].mxu0
    %1179 = vmatprep.mubr.f32.mxu0 0.0
    %1180 = vmatmul.mubr.f32.gmra.mrb[0].mxu0 %v1074
    %v1181 = vpop.f32.mrb[0].mxu0
    %v1182 = vadd.f32 %v38, %v1181
    %v1183 = vpop.f32.mrb[0].mxu0
    %1184 = vmatprep.mubr.f32.mxu0 0.0
    %1185 = vmatmul.mubr.f32.gmra.mrb[0].mxu0 %v1076
    %v1186 = vpop.f32.mrb[0].mxu0
    %v1187 = vadd.f32 %v39, %v1186
    %v1188 = vpop.f32.mrb[0].mxu0
    %1189 = vmatprep.mubr.f32.mxu0 0.0
    %1190 = vmatmul.mubr.f32.gmra.mrb[0].mxu0 %v1078
    %v1191 = vpop.f32.mrb[0].mxu0
    %v1192 = vadd.f32 %v40, %v1191
    %v1193 = vpop.f32.mrb[0].mxu0
    %1194 = vmatprep.mubr.f32.mxu0 0.0
    %1195 = vmatmul.mubr.f32.gmra.mrb[0].mxu0 %v1080
    %v1196 = vpop.f32.mrb[0].mxu0
    %v1197 = vadd.f32 %v41, %v1196
    %v1198 = vpop.f32.mrb[0].mxu0
    %1199 = vmatprep.mubr.f32.mxu0 0.0
    %1200 = vmatmul.mubr.f32.gmra.mrb[0].mxu0 %v1082
    %v1201 = vpop.f32.mrb[0].mxu0
    %v1202 = vadd.f32 %v42, %v1201
    %v1203 = vpop.f32.mrb[0].mxu0
    %1204 = vdwg.mxu0
    %v1205 = vsel %vm302, %v1167, -inf
    %1206 = vmax.xlane.f32.xlu0 %v1205
    %v1207 = vpop.xlane.xlu0 %1206
    %v1208 = vsel %vm302, %v1172, -inf
    %1209 = vmax.xlane.f32.xlu0 %v1208
    %v1210 = vpop.xlane.xlu0 %1209
    %v1211 = vsel %vm302, %v1177, -inf
    %1212 = vmax.xlane.f32.xlu0 %v1211
    %v1213 = vpop.xlane.xlu0 %1212
    %v1214 = vsel %vm302, %v1182, -inf
    %1215 = vmax.xlane.f32.xlu0 %v1214
    %v1216 = vpop.xlane.xlu0 %1215
    %v1217 = vsel %vm302, %v1187, -inf
    %1218 = vmax.xlane.f32.xlu0 %v1217
    %v1219 = vpop.xlane.xlu0 %1218
    %v1220 = vsel %vm302, %v1192, -inf
    %1221 = vmax.xlane.f32.xlu0 %v1220
    %v1222 = vpop.xlane.xlu0 %1221
    %v1223 = vsel %vm302, %v1197, -inf
    %1224 = vmax.xlane.f32.xlu0 %v1223
    %v1225 = vpop.xlane.xlu0 %1224
    %v1226 = vsel %vm302, %v1202, -inf
    %1227 = vmax.xlane.f32.xlu0 %v1226
    %v1228 = vpop.xlane.xlu0 %1227
    %v1229 = vsub.f32 %v1167, %v1207
    %v1230 = vsub.f32 %v1172, %v1210
    %v1231 = vsub.f32 %v1177, %v1213
    %v1232 = vsub.f32 %v1182, %v1216
    %v1233 = vsub.f32 %v1187, %v1219
    %v1234 = vsub.f32 %v1192, %v1222
    %v1235 = vsub.f32 %v1197, %v1225
    %v1236 = vsub.f32 %v1202, %v1228
    %v1237 = vmul.f32 %v1229, 1.442695
    %v1238 = vpow.pop %v1237
    %v1239 = vmul.f32 %v1230, 1.442695
    %v1240 = vpow.pop %v1239
    %v1241 = vmul.f32 %v1231, 1.442695
    %v1242 = vpow.pop %v1241
    %v1243 = vmul.f32 %v1232, 1.442695
    %v1244 = vpow.pop %v1243
    %v1245 = vmul.f32 %v1233, 1.442695
    %v1246 = vpow.pop %v1245
    %v1247 = vmul.f32 %v1234, 1.442695
    %v1248 = vpow.pop %v1247
    %v1249 = vmul.f32 %v1235, 1.442695
    %v1250 = vpow.pop %v1249
    %v1251 = vmul.f32 %v1236, 1.442695
    %v1252 = vpow.pop %v1251
    %v1253 = vsel %vm302, %v1238, 0.0
    %1254 = vadd.xlane.f32.xlu0 %v1253
    %v1255 = vpop.xlane.xlu0 %1254
    %v1256 = vsel %vm302, %v1240, 0.0
    %1257 = vadd.xlane.f32.xlu0 %v1256
    %v1258 = vpop.xlane.xlu0 %1257
    %v1259 = vsel %vm302, %v1242, 0.0
    %1260 = vadd.xlane.f32.xlu0 %v1259
    %v1261 = vpop.xlane.xlu0 %1260
    %v1262 = vsel %vm302, %v1244, 0.0
    %1263 = vadd.xlane.f32.xlu0 %v1262
    %v1264 = vpop.xlane.xlu0 %1263
    %v1265 = vsel %vm302, %v1246, 0.0
    %1266 = vadd.xlane.f32.xlu0 %v1265
    %v1267 = vpop.xlane.xlu0 %1266
    %v1268 = vsel %vm302, %v1248, 0.0
    %1269 = vadd.xlane.f32.xlu0 %v1268
    %v1270 = vpop.xlane.xlu0 %1269
    %v1271 = vsel %vm302, %v1250, 0.0
    %1272 = vadd.xlane.f32.xlu0 %v1271
    %v1273 = vpop.xlane.xlu0 %1272
    %v1274 = vsel %vm302, %v1252, 0.0
    %1275 = vadd.xlane.f32.xlu0 %v1274
    %v1276 = vpop.xlane.xlu0 %1275
    %v1277 = vrcp.pop %v1255
    %v1278 = vrcp.pop %v1258
    %v1279 = vrcp.pop %v1261
    %v1280 = vrcp.pop %v1264
    %v1281 = vrcp.pop %v1267
    %v1282 = vrcp.pop %v1270
    %v1283 = vrcp.pop %v1273
    %v1284 = vrcp.pop %v1276
    %v1285 = vmul.f32 %v1238, %v1277
    %v1286 = vmul.f32 %v1240, %v1278
    %v1287 = vmul.f32 %v1242, %v1279
    %v1288 = vmul.f32 %v1244, %v1280
    %v1289 = vmul.f32 %v1246, %v1281
    %v1290 = vmul.f32 %v1248, %v1282
    %v1291 = vmul.f32 %v1250, %v1283
    %v1292 = vmul.f32 %v1252, %v1284
    %1293 = vrot.lane.b32.xlu0 %v1030, 112
    %v1294 = vpop.permute.xlu0 %1293
    %1295 = vrot.lane.b32.xlu0 %v1035, 112
    %v1296 = vpop.permute.xlu0 %1295
    %1297 = vrot.lane.b32.xlu0 %v1041, 112
    %v1298 = vpop.permute.xlu0 %1297
    %1299 = vrot.lane.b32.xlu0 %v1043, 112
    %v1300 = vpop.permute.xlu0 %1299
    %1301 = vrot.lane.b32.xlu0 %v1045, 112
    %v1302 = vpop.permute.xlu0 %1301
    %1303 = vrot.lane.b32.xlu0 %v1047, 112
    %v1304 = vpop.permute.xlu0 %1303
    %1305 = vrot.lane.b32.xlu0 %v1049, 112
    %v1306 = vpop.permute.xlu0 %1305
    %1307 = vrot.lane.b32.xlu0 %v1051, 112
    %v1308 = vpop.permute.xlu0 %1307
    %v1318 = vsel %vm302, %v1285, 0
    %v1321 = vsel %vm302, %v1286, 0
    %v1324 = vsel %vm302, %v1287, 0
    %v1327 = vsel %vm302, %v1288, 0
    %v1330 = vsel %vm302, %v1289, 0
    %v1333 = vsel %vm302, %v1290, 0
    %v1336 = vsel %vm302, %v1291, 0
    %v1339 = vsel %vm302, %v1292, 0
    %1341 = vmatprep.subr.mxu0 0.0
    %1342 = vmatpush1.msra.mxu0 %v1294
    %1343 = vmatprep.subr.mxu0 0.0
    %1344 = vmatpush1.msra.mxu0 %v1296
    %1345 = vmatprep.subr.mxu0 0.0
    %1346 = vmatpush1.msra.mxu0 %v1298
    %1347 = vmatprep.subr.mxu0 0.0
    %1348 = vmatpush1.msra.mxu0 %v1300
    %1349 = vmatprep.subr.mxu0 0.0
    %1350 = vmatpush1.msra.mxu0 %v1302
    %1351 = vmatprep.subr.mxu0 0.0
    %1352 = vmatpush1.msra.mxu0 %v1304
    %1353 = vmatprep.subr.mxu0 0.0
    %1354 = vmatpush1.msra.mxu0 %v1306
    %1355 = vmatprep.subr.mxu0 0.0
    %1356 = vmatpush1.msra.mxu0 %v1308
    %1357 = vmatprep.subr.mxu0 0.0
    %1358 = vmatpush1.msra.mxu0 0.0
    %1359 = vmatprep.subr.mxu0 0.0
    %1360 = vmatpush1.msra.mxu0 0.0
    %1361 = vmatprep.subr.mxu0 0.0
    %1362 = vmatpush1.msra.mxu0 0.0
    %1363 = vmatprep.subr.mxu0 0.0
    %1364 = vmatpush1.msra.mxu0 0.0
    %1365 = vmatprep.subr.mxu0 0.0
    %1366 = vmatpush1.msra.mxu0 0.0
    %1367 = vmatprep.subr.mxu0 0.0
    %1368 = vmatpush1.msra.mxu0 0.0
    %1369 = vmatprep.subr.mxu0 0.0
    %1370 = vmatpush1.msra.mxu0 0.0
    %1371 = vmatprep.subr.mxu0 0.0
    %1372 = vmatpush1.msra.mxu0 0.0
    %1373 = vmatprep.subr.mxu0 0.0
    %1374 = vmatpush1.msra.mxu0 0.0
    %1375 = vmatprep.subr.mxu0 0.0
    %1376 = vmatpush1.msra.mxu0 0.0
    %1377 = vmatprep.subr.mxu0 0.0
    %1378 = vmatpush1.msra.mxu0 0.0
    %1379 = vmatprep.subr.mxu0 0.0
    %1380 = vmatpush1.msra.mxu0 0.0
    %1381 = vmatprep.subr.mxu0 0.0
    %1382 = vmatpush1.msra.mxu0 0.0
    %1383 = vmatprep.subr.mxu0 0.0
    %1384 = vmatpush1.msra.mxu0 0.0
    %1385 = vmatprep.subr.mxu0 0.0
    %1386 = vmatpush1.msra.mxu0 0.0
    %1387 = vmatprep.subr.mxu0 0.0
    %1388 = vmatpush1.msra.mxu0 0.0
    %1389 = vmatprep.subr.mxu0 0.0
    %1390 = vmatpush1.msra.mxu0 0.0
    %1391 = vmatprep.subr.mxu0 0.0
    %1392 = vmatpush1.msra.mxu0 0.0
    %1393 = vmatprep.subr.mxu0 0.0
    %1394 = vmatpush1.msra.mxu0 0.0
    %1395 = vmatprep.subr.mxu0 0.0
    %1396 = vmatpush1.msra.mxu0 0.0
    %1397 = vmatprep.subr.mxu0 0.0
    %1398 = vmatpush1.msra.mxu0 0.0
    %1399 = vmatprep.subr.mxu0 0.0
    %1400 = vmatpush1.msra.mxu0 0.0
    %1401 = vmatprep.subr.mxu0 0.0
    %1402 = vmatpush1.msra.mxu0 0.0
    %1403 = vmatprep.subr.mxu0 0.0
    %1404 = vmatpush1.msra.mxu0 0.0
    %1405 = vmatprep.mubr.f32.mxu0 0.0
    %1406 = vmatmul.mubr.f32.gmra.mrb[0].mxu0 %v1318
    %v1407 = vpop.f32.mrb[0].mxu0
    %v1408 = vadd.f32 0.0, %v1407
    %v1409 = vpop.f32.mrb[0].mxu0
    %1410 = vmatprep.mubr.f32.mxu0 0.0
    %1411 = vmatmul.mubr.f32.gmra.mrb[0].mxu0 %v1321
    %v1412 = vpop.f32.mrb[0].mxu0
    %v1413 = vadd.f32 0.0, %v1412
    %v1414 = vpop.f32.mrb[0].mxu0
    %1415 = vmatprep.mubr.f32.mxu0 0.0
    %1416 = vmatmul.mubr.f32.gmra.mrb[0].mxu0 %v1324
    %v1417 = vpop.f32.mrb[0].mxu0
    %v1418 = vadd.f32 0.0, %v1417
    %v1419 = vpop.f32.mrb[0].mxu0
    %1420 = vmatprep.mubr.f32.mxu0 0.0
    %1421 = vmatmul.mubr.f32.gmra.mrb[0].mxu0 %v1327
    %v1422 = vpop.f32.mrb[0].mxu0
    %v1423 = vadd.f32 0.0, %v1422
    %v1424 = vpop.f32.mrb[0].mxu0
    %1425 = vmatprep.mubr.f32.mxu0 0.0
    %1426 = vmatmul.mubr.f32.gmra.mrb[0].mxu0 %v1330
    %v1427 = vpop.f32.mrb[0].mxu0
    %v1428 = vadd.f32 0.0, %v1427
    %v1429 = vpop.f32.mrb[0].mxu0
    %1430 = vmatprep.mubr.f32.mxu0 0.0
    %1431 = vmatmul.mubr.f32.gmra.mrb[0].mxu0 %v1333
    %v1432 = vpop.f32.mrb[0].mxu0
    %v1433 = vadd.f32 0.0, %v1432
    %v1434 = vpop.f32.mrb[0].mxu0
    %1435 = vmatprep.mubr.f32.mxu0 0.0
    %1436 = vmatmul.mubr.f32.gmra.mrb[0].mxu0 %v1336
    %v1437 = vpop.f32.mrb[0].mxu0
    %v1438 = vadd.f32 0.0, %v1437
    %v1439 = vpop.f32.mrb[0].mxu0
    %1440 = vmatprep.mubr.f32.mxu0 0.0
    %1441 = vmatmul.mubr.f32.gmra.mrb[0].mxu0 %v1339
    %v1442 = vpop.f32.mrb[0].mxu0
    %v1443 = vadd.f32 0.0, %v1442
    %v1444 = vpop.f32.mrb[0].mxu0
    %1445 = vdwg.mxu0
    %1448 = vrot.lane.b32.xlu0 %v1418, 8
    %v1449 = vpop.permute.xlu0 %1448
    %1450 = vrot.lane.b32.xlu0 %v1423, 8
    %v1451 = vpop.permute.xlu0 %1450
    %1456 = vrot.lane.b32.xlu0 %v1428, 16
    %v1457 = vpop.permute.xlu0 %1456
    %1458 = vrot.lane.b32.xlu0 %v1433, 16
    %v1459 = vpop.permute.xlu0 %1458
    %1464 = vrot.lane.b32.xlu0 %v1438, 24
    %v1465 = vpop.permute.xlu0 %1464
    %1466 = vrot.lane.b32.xlu0 %v1443, 24
    %v1467 = vpop.permute.xlu0 %1466
    %v1470 = vsel %vm164, %v1408, %v1449
    %v1471 = vsel %vm164, %v1413, %v1451
    %v1472 = vsel %vm570, %v1470, %v1457
    %v1473 = vsel %vm570, %v1471, %v1459
    %v1474 = vsel %vm573, %v1472, %v1465
    %v1475 = vsel %vm573, %v1473, %v1467
    %s1476 = scalar_lea.vmem %s3, 32
    %v1477 = vld [vmem:[%s1476] sm:$0xff]
    %v1478 = vld [vmem:[%s1476 + $0x8] sm:$0xff]
    %v1479 = vld [vmem:[%s1476 + $0x10] sm:$0xff]
    %v1480 = vld [vmem:[%s1476 + $0x18] sm:$0xff]
    %v1481 = vlaneseq
    %v1482 = vshrl.u32 %v1481, 7
    %v1483 = vsub.s32 1, %v1482
    %v1484 = vrot.slane %v947, %v1483
    %v1486 = vsel %vm52, %v1474, 0
    %v1489 = vsel %vm52, %v1475, 0
    %1491 = vmatprep.subr.mxu0 0.0
    %1492 = vmatpush1.msra.mxu0 %v1477
    %1493 = vmatprep.subr.mxu0 0.0
    %1494 = vmatpush1.msra.mxu0 %v1478
    %1495 = vmatprep.subr.mxu0 0.0
    %1496 = vmatpush1.msra.mxu0 %v1479
    %1497 = vmatprep.subr.mxu0 0.0
    %1498 = vmatpush1.msra.mxu0 %v1480
    %1499 = vmatprep.subr.mxu0 0.0
    %1500 = vmatpush1.msra.mxu0 0.0
    %1501 = vmatprep.subr.mxu0 0.0
    %1502 = vmatpush1.msra.mxu0 0.0
    %1503 = vmatprep.subr.mxu0 0.0
    %1504 = vmatpush1.msra.mxu0 0.0
    %1505 = vmatprep.subr.mxu0 0.0
    %1506 = vmatpush1.msra.mxu0 0.0
    %1507 = vmatprep.subr.mxu0 0.0
    %1508 = vmatpush1.msra.mxu0 0.0
    %1509 = vmatprep.subr.mxu0 0.0
    %1510 = vmatpush1.msra.mxu0 0.0
    %1511 = vmatprep.subr.mxu0 0.0
    %1512 = vmatpush1.msra.mxu0 0.0
    %1513 = vmatprep.subr.mxu0 0.0
    %1514 = vmatpush1.msra.mxu0 0.0
    %1515 = vmatprep.subr.mxu0 0.0
    %1516 = vmatpush1.msra.mxu0 0.0
    %1517 = vmatprep.subr.mxu0 0.0
    %1518 = vmatpush1.msra.mxu0 0.0
    %1519 = vmatprep.subr.mxu0 0.0
    %1520 = vmatpush1.msra.mxu0 0.0
    %1521 = vmatprep.subr.mxu0 0.0
    %1522 = vmatpush1.msra.mxu0 0.0
    %1523 = vmatprep.subr.mxu0 0.0
    %1524 = vmatpush1.msra.mxu0 0.0
    %1525 = vmatprep.subr.mxu0 0.0
    %1526 = vmatpush1.msra.mxu0 0.0
    %1527 = vmatprep.subr.mxu0 0.0
    %1528 = vmatpush1.msra.mxu0 0.0
    %1529 = vmatprep.subr.mxu0 0.0
    %1530 = vmatpush1.msra.mxu0 0.0
    %1531 = vmatprep.subr.mxu0 0.0
    %1532 = vmatpush1.msra.mxu0 0.0
    %1533 = vmatprep.subr.mxu0 0.0
    %1534 = vmatpush1.msra.mxu0 0.0
    %1535 = vmatprep.subr.mxu0 0.0
    %1536 = vmatpush1.msra.mxu0 0.0
    %1537 = vmatprep.subr.mxu0 0.0
    %1538 = vmatpush1.msra.mxu0 0.0
    %1539 = vmatprep.subr.mxu0 0.0
    %1540 = vmatpush1.msra.mxu0 0.0
    %1541 = vmatprep.subr.mxu0 0.0
    %1542 = vmatpush1.msra.mxu0 0.0
    %1543 = vmatprep.subr.mxu0 0.0
    %1544 = vmatpush1.msra.mxu0 0.0
    %1545 = vmatprep.subr.mxu0 0.0
    %1546 = vmatpush1.msra.mxu0 0.0
    %1547 = vmatprep.subr.mxu0 0.0
    %1548 = vmatpush1.msra.mxu0 0.0
    %1549 = vmatprep.subr.mxu0 0.0
    %1550 = vmatpush1.msra.mxu0 0.0
    %1551 = vmatprep.subr.mxu0 0.0
    %1552 = vmatpush1.msra.mxu0 0.0
    %1553 = vmatprep.subr.mxu0 0.0
    %1554 = vmatpush1.msra.mxu0 0.0
    %1555 = vmatprep.mubr.f32.mxu0 0.0
    %1556 = vmatmul.mubr.f32.gmra.mrb[0].mxu0 %v1486
    %v1557 = vpop.f32.mrb[0].mxu0
    %v1558 = vadd.f32 %v1484, %v1557
    %v1559 = vpop.f32.mrb[0].mxu0
    %1560 = vmatprep.mubr.f32.mxu0 0.0
    %1561 = vmatmul.mubr.f32.gmra.mrb[0].mxu0 %v1489
    %v1562 = vpop.f32.mrb[0].mxu0
    %v1563 = vadd.f32 %v1484, %v1562
    %v1564 = vpop.f32.mrb[0].mxu0
    %1565 = vdwg.mxu0
    %v1566 = vadd.f32 %v944, %v1558
    %v1567 = vadd.f32 %v945, %v1563
    %v1568 = vsel %vm52, %v1566, 0.0
    %1569 = vadd.xlane.f32.xlu0 %v1568
    %v1570 = vpop.xlane.xlu0 %1569
    %v1571 = vsel %vm52, %v1567, 0.0
    %1572 = vadd.xlane.f32.xlu0 %v1571
    %v1573 = vpop.xlane.xlu0 %1572
    %v1574 = vmul.f32 %v1570, %v673
    %v1575 = vmul.f32 %v1573, %v673
    %v1576 = vsub.f32 %v1566, %v1574
    %v1577 = vsub.f32 %v1567, %v1575
    %v1578 = vmul.f32 %v1576, %v1576
    %v1579 = vmul.f32 %v1577, %v1577
    %v1580 = vsel %vm52, %v1578, 0.0
    %1581 = vadd.xlane.f32.xlu0 %v1580
    %v1582 = vpop.xlane.xlu0 %1581
    %v1583 = vsel %vm52, %v1579, 0.0
    %1584 = vadd.xlane.f32.xlu0 %v1583
    %v1585 = vpop.xlane.xlu0 %1584
    %v1586 = vmul.f32 %v1582, %v673
    %v1587 = vmul.f32 %v1585, %v673
    %v1588 = vadd.f32 %v1586, 1e-12
    %v1589 = vadd.f32 %v1587, 1e-12
    %v1590 = vrsqrt.pop %v1588
    %v1591 = vrsqrt.pop %v1589
    %v1592 = vmul.f32 %v1576, %v1590
    %v1593 = vmul.f32 %v1577, %v1591
    %v1594 = vlaneseq
    %v1595 = vshrl.u32 %v1594, 7
    %v1596 = vsub.s32 2, %v1595
    %v1597 = vrot.slane %v947, %v1596
    %v1598 = vmul.f32 %v1592, %v1597
    %v1599 = vmul.f32 %v1593, %v1597
    %v1600 = vlaneseq
    %v1601 = vshrl.u32 %v1600, 7
    %v1602 = vsub.s32 3, %v1601
    %v1603 = vrot.slane %v947, %v1602
    %v1604 = vadd.f32 %v1598, %v1603
    %v1605 = vadd.f32 %v1599, %v1603
    %s1606 = scalar_lea.vmem %s4, 32
    %v1607 = vld [vmem:[%s1606] sm:$0xff]
    %v1608 = vld [vmem:[%s1606 + $0x8] sm:$0xff]
    %v1609 = vld [vmem:[%s1606 + $0x10] sm:$0xff]
    %v1610 = vld [vmem:[%s1606 + $0x18] sm:$0xff]
    %v1611 = vlaneseq
    %v1612 = vshrl.u32 %v1611, 7
    %v1613 = vsub.s32 4, %v1612
    %v1614 = vrot.slane %v947, %v1613
    %v1616 = vsel %vm52, %v1604, 0
    %v1619 = vsel %vm52, %v1605, 0
    %1621 = vmatprep.subr.mxu0 0.0
    %1622 = vmatpush1.msra.mxu0 %v1607
    %1623 = vmatprep.subr.mxu0 0.0
    %1624 = vmatpush1.msra.mxu0 %v1608
    %1625 = vmatprep.subr.mxu0 0.0
    %1626 = vmatpush1.msra.mxu0 %v1609
    %1627 = vmatprep.subr.mxu0 0.0
    %1628 = vmatpush1.msra.mxu0 %v1610
    %1629 = vmatprep.subr.mxu0 0.0
    %1630 = vmatpush1.msra.mxu0 0.0
    %1631 = vmatprep.subr.mxu0 0.0
    %1632 = vmatpush1.msra.mxu0 0.0
    %1633 = vmatprep.subr.mxu0 0.0
    %1634 = vmatpush1.msra.mxu0 0.0
    %1635 = vmatprep.subr.mxu0 0.0
    %1636 = vmatpush1.msra.mxu0 0.0
    %1637 = vmatprep.subr.mxu0 0.0
    %1638 = vmatpush1.msra.mxu0 0.0
    %1639 = vmatprep.subr.mxu0 0.0
    %1640 = vmatpush1.msra.mxu0 0.0
    %1641 = vmatprep.subr.mxu0 0.0
    %1642 = vmatpush1.msra.mxu0 0.0
    %1643 = vmatprep.subr.mxu0 0.0
    %1644 = vmatpush1.msra.mxu0 0.0
    %1645 = vmatprep.subr.mxu0 0.0
    %1646 = vmatpush1.msra.mxu0 0.0
    %1647 = vmatprep.subr.mxu0 0.0
    %1648 = vmatpush1.msra.mxu0 0.0
    %1649 = vmatprep.subr.mxu0 0.0
    %1650 = vmatpush1.msra.mxu0 0.0
    %1651 = vmatprep.subr.mxu0 0.0
    %1652 = vmatpush1.msra.mxu0 0.0
    %1653 = vmatprep.subr.mxu0 0.0
    %1654 = vmatpush1.msra.mxu0 0.0
    %1655 = vmatprep.subr.mxu0 0.0
    %1656 = vmatpush1.msra.mxu0 0.0
    %1657 = vmatprep.subr.mxu0 0.0
    %1658 = vmatpush1.msra.mxu0 0.0
    %1659 = vmatprep.subr.mxu0 0.0
    %1660 = vmatpush1.msra.mxu0 0.0
    %1661 = vmatprep.subr.mxu0 0.0
    %1662 = vmatpush1.msra.mxu0 0.0
    %1663 = vmatprep.subr.mxu0 0.0
    %1664 = vmatpush1.msra.mxu0 0.0
    %1665 = vmatprep.subr.mxu0 0.0
    %1666 = vmatpush1.msra.mxu0 0.0
    %1667 = vmatprep.subr.mxu0 0.0
    %1668 = vmatpush1.msra.mxu0 0.0
    %1669 = vmatprep.subr.mxu0 0.0
    %1670 = vmatpush1.msra.mxu0 0.0
    %1671 = vmatprep.subr.mxu0 0.0
    %1672 = vmatpush1.msra.mxu0 0.0
    %1673 = vmatprep.subr.mxu0 0.0
    %1674 = vmatpush1.msra.mxu0 0.0
    %1675 = vmatprep.subr.mxu0 0.0
    %1676 = vmatpush1.msra.mxu0 0.0
    %1677 = vmatprep.subr.mxu0 0.0
    %1678 = vmatpush1.msra.mxu0 0.0
    %1679 = vmatprep.subr.mxu0 0.0
    %1680 = vmatpush1.msra.mxu0 0.0
    %1681 = vmatprep.subr.mxu0 0.0
    %1682 = vmatpush1.msra.mxu0 0.0
    %1683 = vmatprep.subr.mxu0 0.0
    %1684 = vmatpush1.msra.mxu0 0.0
    %1685 = vmatprep.mubr.f32.mxu0 0.0
    %1686 = vmatmul.mubr.f32.gmra.mrb[0].mxu0 %v1616
    %v1687 = vpop.f32.mrb[0].mxu0
    %v1688 = vadd.f32 %v1614, %v1687
    %v1689 = vpop.f32.mrb[0].mxu0
    %1690 = vmatprep.mubr.f32.mxu0 0.0
    %1691 = vmatmul.mubr.f32.gmra.mrb[0].mxu0 %v1619
    %v1692 = vpop.f32.mrb[0].mxu0
    %v1693 = vadd.f32 %v1614, %v1692
    %v1694 = vpop.f32.mrb[0].mxu0
    %1695 = vdwg.mxu0
    %v1696 = vmul.f32 %v1688, 0.5
    %v1697 = vmul.f32 %v1693, 0.5
    %v1698 = vmul.f32 %v1688, 0.044715
    %v1699 = vmul.f32 %v1693, 0.044715
    %v1700 = vmul.f32 %v1698, %v1688
    %v1701 = vmul.f32 %v1699, %v1693
    %v1702 = vmul.f32 %v1700, %v1688
    %v1703 = vmul.f32 %v1701, %v1693
    %v1704 = vadd.f32 %v1688, %v1702
    %v1705 = vadd.f32 %v1693, %v1703
    %v1706 = vmul.f32 %v1704, 0.7978846
    %v1707 = vmul.f32 %v1705, 0.7978846
    %v1708 = vtanh.pop %v1706
    %v1709 = vtanh.pop %v1707
    %v1710 = vadd.f32 %v1708, 1.0
    %v1711 = vadd.f32 %v1709, 1.0
    %v1712 = vmul.f32 %v1696, %v1710
    %v1713 = vmul.f32 %v1697, %v1711
    %s1714 = scalar_lea.vmem %s5, 64
    %v1715 = vld [vmem:[%s1714] sm:$0xff]
    %v1716 = vld [vmem:[%s1714 + $0x8] sm:$0xff]
    %v1717 = vld [vmem:[%s1714 + $0x10] sm:$0xff]
    %v1718 = vld [vmem:[%s1714 + $0x18] sm:$0xff]
    %v1719 = vld [vmem:[%s1714 + $0x20] sm:$0xff]
    %v1720 = vld [vmem:[%s1714 + $0x28] sm:$0xff]
    %v1721 = vld [vmem:[%s1714 + $0x30] sm:$0xff]
    %v1722 = vld [vmem:[%s1714 + $0x38] sm:$0xff]
    %v1723 = vlaneseq
    %v1724 = vshrl.u32 %v1723, 7
    %v1725 = vsub.s32 5, %v1724
    %v1726 = vrot.slane %v947, %v1725
    %v1728 = vsel %vm302, %v1712, 0
    %v1731 = vsel %vm302, %v1713, 0
    %1733 = vmatprep.subr.mxu0 0.0
    %1734 = vmatpush1.msra.mxu0 %v1715
    %1735 = vmatprep.subr.mxu0 0.0
    %1736 = vmatpush1.msra.mxu0 %v1716
    %1737 = vmatprep.subr.mxu0 0.0
    %1738 = vmatpush1.msra.mxu0 %v1717
    %1739 = vmatprep.subr.mxu0 0.0
    %1740 = vmatpush1.msra.mxu0 %v1718
    %1741 = vmatprep.subr.mxu0 0.0
    %1742 = vmatpush1.msra.mxu0 %v1719
    %1743 = vmatprep.subr.mxu0 0.0
    %1744 = vmatpush1.msra.mxu0 %v1720
    %1745 = vmatprep.subr.mxu0 0.0
    %1746 = vmatpush1.msra.mxu0 %v1721
    %1747 = vmatprep.subr.mxu0 0.0
    %1748 = vmatpush1.msra.mxu0 %v1722
    %1749 = vmatprep.subr.mxu0 0.0
    %1750 = vmatpush1.msra.mxu0 0.0
    %1751 = vmatprep.subr.mxu0 0.0
    %1752 = vmatpush1.msra.mxu0 0.0
    %1753 = vmatprep.subr.mxu0 0.0
    %1754 = vmatpush1.msra.mxu0 0.0
    %1755 = vmatprep.subr.mxu0 0.0
    %1756 = vmatpush1.msra.mxu0 0.0
    %1757 = vmatprep.subr.mxu0 0.0
    %1758 = vmatpush1.msra.mxu0 0.0
    %1759 = vmatprep.subr.mxu0 0.0
    %1760 = vmatpush1.msra.mxu0 0.0
    %1761 = vmatprep.subr.mxu0 0.0
    %1762 = vmatpush1.msra.mxu0 0.0
    %1763 = vmatprep.subr.mxu0 0.0
    %1764 = vmatpush1.msra.mxu0 0.0
    %1765 = vmatprep.subr.mxu0 0.0
    %1766 = vmatpush1.msra.mxu0 0.0
    %1767 = vmatprep.subr.mxu0 0.0
    %1768 = vmatpush1.msra.mxu0 0.0
    %1769 = vmatprep.subr.mxu0 0.0
    %1770 = vmatpush1.msra.mxu0 0.0
    %1771 = vmatprep.subr.mxu0 0.0
    %1772 = vmatpush1.msra.mxu0 0.0
    %1773 = vmatprep.subr.mxu0 0.0
    %1774 = vmatpush1.msra.mxu0 0.0
    %1775 = vmatprep.subr.mxu0 0.0
    %1776 = vmatpush1.msra.mxu0 0.0
    %1777 = vmatprep.subr.mxu0 0.0
    %1778 = vmatpush1.msra.mxu0 0.0
    %1779 = vmatprep.subr.mxu0 0.0
    %1780 = vmatpush1.msra.mxu0 0.0
    %1781 = vmatprep.subr.mxu0 0.0
    %1782 = vmatpush1.msra.mxu0 0.0
    %1783 = vmatprep.subr.mxu0 0.0
    %1784 = vmatpush1.msra.mxu0 0.0
    %1785 = vmatprep.subr.mxu0 0.0
    %1786 = vmatpush1.msra.mxu0 0.0
    %1787 = vmatprep.subr.mxu0 0.0
    %1788 = vmatpush1.msra.mxu0 0.0
    %1789 = vmatprep.subr.mxu0 0.0
    %1790 = vmatpush1.msra.mxu0 0.0
    %1791 = vmatprep.subr.mxu0 0.0
    %1792 = vmatpush1.msra.mxu0 0.0
    %1793 = vmatprep.subr.mxu0 0.0
    %1794 = vmatpush1.msra.mxu0 0.0
    %1795 = vmatprep.subr.mxu0 0.0
    %1796 = vmatpush1.msra.mxu0 0.0
    %1797 = vmatprep.mubr.f32.mxu0 0.0
    %1798 = vmatmul.mubr.f32.gmra.mrb[0].mxu0 %v1728
    %v1799 = vpop.f32.mrb[0].mxu0
    %v1800 = vadd.f32 %v1726, %v1799
    %v1801 = vpop.f32.mrb[0].mxu0
    %1802 = vmatprep.mubr.f32.mxu0 0.0
    %1803 = vmatmul.mubr.f32.gmra.mrb[0].mxu0 %v1731
    %v1804 = vpop.f32.mrb[0].mxu0
    %v1805 = vadd.f32 %v1726, %v1804
    %v1806 = vpop.f32.mrb[0].mxu0
    %1807 = vdwg.mxu0
    %v1808 = vadd.f32 %v1604, %v1800
    %v1809 = vadd.f32 %v1605, %v1805
    %v1810 = vsel %vm52, %v1808, 0.0
    %1811 = vadd.xlane.f32.xlu0 %v1810
    %v1812 = vpop.xlane.xlu0 %1811
    %v1813 = vsel %vm52, %v1809, 0.0
    %1814 = vadd.xlane.f32.xlu0 %v1813
    %v1815 = vpop.xlane.xlu0 %1814
    %v1816 = vmul.f32 %v1812, %v673
    %v1817 = vmul.f32 %v1815, %v673
    %v1818 = vsub.f32 %v1808, %v1816
    %v1819 = vsub.f32 %v1809, %v1817
    %v1820 = vmul.f32 %v1818, %v1818
    %v1821 = vmul.f32 %v1819, %v1819
    %v1822 = vsel %vm52, %v1820, 0.0
    %1823 = vadd.xlane.f32.xlu0 %v1822
    %v1824 = vpop.xlane.xlu0 %1823
    %v1825 = vsel %vm52, %v1821, 0.0
    %1826 = vadd.xlane.f32.xlu0 %v1825
    %v1827 = vpop.xlane.xlu0 %1826
    %v1828 = vmul.f32 %v1824, %v673
    %v1829 = vmul.f32 %v1827, %v673
    %v1830 = vadd.f32 %v1828, 1e-12
    %v1831 = vadd.f32 %v1829, 1e-12
    %v1832 = vrsqrt.pop %v1830
    %v1833 = vrsqrt.pop %v1831
    %v1834 = vmul.f32 %v1818, %v1832
    %v1835 = vmul.f32 %v1819, %v1833
    %v1836 = vlaneseq
    %v1837 = vshrl.u32 %v1836, 7
    %v1838 = vsub.s32 6, %v1837
    %v1839 = vrot.slane %v947, %v1838
    %v1840 = vmul.f32 %v1834, %v1839
    %v1841 = vmul.f32 %v1835, %v1839
    %v1842 = vlaneseq
    %v1843 = vshrl.u32 %v1842, 7
    %v1844 = vsub.s32 7, %v1843
    %v1845 = vrot.slane %v947, %v1844
    %v1846 = vadd.f32 %v1840, %v1845
    %v1847 = vadd.f32 %v1841, %v1845
    %v1848 = vsel %vm52, %v1846, 0.0
    %v1849 = vrot.slane %v1848, 4
    %v1850 = vadd.f32 %v1848, %v1849
    %v1851 = vrot.slane %v1850, 2
    %v1852 = vadd.f32 %v1850, %v1851
    %v1853 = vrot.slane %v1852, 1
    %v1854 = vadd.f32 %v1852, %v1853
    %v1855 = vsel %vm52, %v1847, 0.0
    %v1856 = vrot.slane %v1855, 4
    %v1857 = vadd.f32 %v1855, %v1856
    %v1858 = vrot.slane %v1857, 2
    %v1859 = vadd.f32 %v1857, %v1858
    %v1860 = vrot.slane %v1859, 1
    %v1861 = vadd.f32 %v1859, %v1860
    %v1862 = vrcp.pop 8.0
    %v1863 = vmul.f32 %v1854, %v1862
    %v1864 = vmul.f32 %v1861, %v1862
    %v1865 = vsel %vm52, %v1846, -inf
    %v1866 = vrot.slane %v1865, 4
    %v1867 = vmax.f32 %v1865, %v1866
    %v1868 = vrot.slane %v1867, 2
    %v1869 = vmax.f32 %v1867, %v1868
    %v1870 = vrot.slane %v1869, 1
    %v1871 = vmax.f32 %v1869, %v1870
    %v1872 = vsel %vm52, %v1847, -inf
    %v1873 = vrot.slane %v1872, 4
    %v1874 = vmax.f32 %v1872, %v1873
    %v1875 = vrot.slane %v1874, 2
    %v1876 = vmax.f32 %v1874, %v1875
    %v1877 = vrot.slane %v1876, 1
    %v1878 = vmax.f32 %v1876, %v1877
    %vm1881 = vcmask 1041409
    %v1882 = vsel %vm1881, %v1864, %v1863
    %v1886 = vsel %vm1881, %v1878, %v1871
    %1887 = vrot.lane.b32.xlu0 %v1886, 32
    %v1888 = vpop.permute.xlu0 %1887
    %v1890 = vsel %vm52, %v1882, %v1888
    %v1891 = vld [vmem:[%s7] sm:$0xff]
    %v1892 = vld [vmem:[%s7 + $0x8] sm:$0xff]
    %v1893 = vld [vmem:[%s7 + $0x10] sm:$0xff]
    %v1894 = vld [vmem:[%s7 + $0x18] sm:$0xff]
    %v1895 = vld [vmem:[%s7 + $0x20] sm:$0xff]
    %v1896 = vld [vmem:[%s7 + $0x28] sm:$0xff]
    %v1897 = vld [vmem:[%s7 + $0x30] sm:$0xff]
    %v1898 = vld [vmem:[%s7 + $0x38] sm:$0xff]
    %v1899 = vld [vmem:[%s8] sm:$0x1]
    %v1901 = vlaneseq
    %v1902 = vshrl.u32 %v1901, 7
    %v1903 = vsub.s32 0, %v1902
    %v1904 = vrot.slane %v1899, %v1903
    %v1907 = vsel %vm302, %v1890, 0
    %1909 = vmatprep.subr.mxu0 0.0
    %1910 = vmatpush1.msra.mxu0 %v1891
    %1911 = vmatprep.subr.mxu0 0.0
    %1912 = vmatpush1.msra.mxu0 %v1892
    %1913 = vmatprep.subr.mxu0 0.0
    %1914 = vmatpush1.msra.mxu0 %v1893
    %1915 = vmatprep.subr.mxu0 0.0
    %1916 = vmatpush1.msra.mxu0 %v1894
    %1917 = vmatprep.subr.mxu0 0.0
    %1918 = vmatpush1.msra.mxu0 %v1895
    %1919 = vmatprep.subr.mxu0 0.0
    %1920 = vmatpush1.msra.mxu0 %v1896
    %1921 = vmatprep.subr.mxu0 0.0
    %1922 = vmatpush1.msra.mxu0 %v1897
    %1923 = vmatprep.subr.mxu0 0.0
    %1924 = vmatpush1.msra.mxu0 %v1898
    %1925 = vmatprep.subr.mxu0 0.0
    %1926 = vmatpush1.msra.mxu0 0.0
    %1927 = vmatprep.subr.mxu0 0.0
    %1928 = vmatpush1.msra.mxu0 0.0
    %1929 = vmatprep.subr.mxu0 0.0
    %1930 = vmatpush1.msra.mxu0 0.0
    %1931 = vmatprep.subr.mxu0 0.0
    %1932 = vmatpush1.msra.mxu0 0.0
    %1933 = vmatprep.subr.mxu0 0.0
    %1934 = vmatpush1.msra.mxu0 0.0
    %1935 = vmatprep.subr.mxu0 0.0
    %1936 = vmatpush1.msra.mxu0 0.0
    %1937 = vmatprep.subr.mxu0 0.0
    %1938 = vmatpush1.msra.mxu0 0.0
    %1939 = vmatprep.subr.mxu0 0.0
    %1940 = vmatpush1.msra.mxu0 0.0
    %1941 = vmatprep.subr.mxu0 0.0
    %1942 = vmatpush1.msra.mxu0 0.0
    %1943 = vmatprep.subr.mxu0 0.0
    %1944 = vmatpush1.msra.mxu0 0.0
    %1945 = vmatprep.subr.mxu0 0.0
    %1946 = vmatpush1.msra.mxu0 0.0
    %1947 = vmatprep.subr.mxu0 0.0
    %1948 = vmatpush1.msra.mxu0 0.0
    %1949 = vmatprep.subr.mxu0 0.0
    %1950 = vmatpush1.msra.mxu0 0.0
    %1951 = vmatprep.subr.mxu0 0.0
    %1952 = vmatpush1.msra.mxu0 0.0
    %1953 = vmatprep.subr.mxu0 0.0
    %1954 = vmatpush1.msra.mxu0 0.0
    %1955 = vmatprep.subr.mxu0 0.0
    %1956 = vmatpush1.msra.mxu0 0.0
    %1957 = vmatprep.subr.mxu0 0.0
    %1958 = vmatpush1.msra.mxu0 0.0
    %1959 = vmatprep.subr.mxu0 0.0
    %1960 = vmatpush1.msra.mxu0 0.0
    %1961 = vmatprep.subr.mxu0 0.0
    %1962 = vmatpush1.msra.mxu0 0.0
    %1963 = vmatprep.subr.mxu0 0.0
    %1964 = vmatpush1.msra.mxu0 0.0
    %1965 = vmatprep.subr.mxu0 0.0
    %1966 = vmatpush1.msra.mxu0 0.0
    %1967 = vmatprep.subr.mxu0 0.0
    %1968 = vmatpush1.msra.mxu0 0.0
    %1969 = vmatprep.subr.mxu0 0.0
    %1970 = vmatpush1.msra.mxu0 0.0
    %1971 = vmatprep.subr.mxu0 0.0
    %1972 = vmatpush1.msra.mxu0 0.0
    %1973 = vmatprep.mubr.f32.mxu0 0.0
    %1974 = vmatmul.mubr.f32.gmra.mrb[0].mxu0 %v1907
    %v1975 = vpop.f32.mrb[0].mxu0
    %v1976 = vadd.f32 %v1904, %v1975
    %v1977 = vpop.f32.mrb[0].mxu0
    %1978 = vdwg.mxu0
    %1979 = vst [vmem:[#allocation2] sm:$0x3] %v1976
    // Predicated region
    $region38: #{bert_classifi_forward.1} parent=1 // pred_check
      _
    $region39: #{bert_classifi_forward.1} parent=1 // pred_check_branch
      %1981 = sbr.rel (0) target = $region41
    $region40: #{bert_classifi_forward.1} parent=1 // pred_region
      %s1983 = ssub.s32 32, 32
      %1984 = vsyncadd [#allocation3], %s1983
      %s1986 = sshll.u32 [#allocation2], 4
      %s1987 = int_to_ptr.vmem [resolvable:$true] %s1986
      %1989 = dma.vmem_to_hbm [thread:$0]  %s1987, 32, %s9, [#allocation3]
    $region41: #{bert_classifi_forward.1} parent=1 // pred_fallthru
      _
    // Predicated region
    $region42: #{bert_classifi_forward.1} parent=1 // pred_check
      _
    $region43: #{bert_classifi_forward.1} parent=1 // pred_check_branch
      %1991 = sbr.rel (0) target = $region45
    $region44: #{bert_classifi_forward.1} parent=1 // pred_region
      %1992 = dma.done [#allocation3], 32
    $region45: #{bert_classifi_forward.1} parent=1 // pred_fallthru
      _
    %1993 = vsyncpa [#allocation3], 1

</llo_original>
